<compile_context>
chip_gen: v7x
topology: tpu7x:2x2x1
jax: 0.10.0
libtpu: 0.0.40
codegen_flags: <defaults>
</compile_context>

<pallas_src>
import math
from functools import partial

import jax
import jax.numpy as jnp
from jax import lax
from jax.experimental import pallas as pl
from jax.experimental.pallas import tpu as pltpu


def _few_shot_seq_labeler_kernel(
    test_reps_ref,   # (Bt, T, D)    bf16
    test_mask_ref,   # (Bt, 1, T)    f32
    test_tgt_ref,    # (Bt, 1, T)    i32  (raw targets, 0 = [PAD])
    sup_reps_ref,    # (Bt, N, D)    bf16 (N = support_size * support_len)
    sup_mask_ref,    # (Bt, 1, N)    f32
    sup_tgt_ref,     # (Bt, 1, N)    i32  (raw support tag indices, 0 = [PAD])
    emission_ref,    # out (Bt, Cpad, T) f32, lane-dense (T on lanes), padded classes
    stats_ref,       # out (1, 1, 128)   f32, lanes: 0=loss_sum 1=mask_sum 2=sep_o_sum
    *, scale, n_cls,
):
    NEG = jnp.float32(-1e30)
    Bt, Cpad, T = emission_ref.shape
    N = sup_reps_ref.shape[1]

    # ---- masked one-hot built in-kernel (prototype row c <-> raw tag c+1) ---
    cls_n = lax.broadcasted_iota(jnp.int32, (Bt, Cpad, N), 1)
    masked_oh = jnp.where(cls_n + 1 == sup_tgt_ref[...],
                          sup_mask_ref[...], 0.0)               # (Bt, Cpad, N) f32
    counts = jnp.sum(masked_oh, axis=2, keepdims=True)          # (Bt, Cpad, 1)

    # ---- prototypes.  MXU batched matmul #1: (Cpad,N) @ (N,D) per batch -----
    proto_sum = jnp.einsum('bcn,bnd->bcd',
                           masked_oh.astype(jnp.bfloat16), sup_reps_ref[...],
                           preferred_element_type=jnp.float32)  # (Bt, Cpad, D)
    # fold 1/max(count,1) and the emission scale into the prototype (exact)
    proto = proto_sum * (scale / jnp.maximum(counts, 1.0))      # padded rows = 0

    # ---- emission.  MXU batched matmul #2: (Cpad,D) . (T,D)^T per batch -----
    logits = jnp.einsum('bcd,btd->bct',
                        proto.astype(jnp.bfloat16), test_reps_ref[...],
                        preferred_element_type=jnp.float32)     # (Bt, Cpad, T)
    emission_ref[...] = logits                                  # full-sublane store

    tgt = jnp.maximum(test_tgt_ref[...] - 1, 0)                 # (Bt, 1, T) relu(t-1)
    mask = test_mask_ref[...]                                   # (Bt, 1, T)
    cls_t = lax.broadcasted_iota(jnp.int32, (Bt, Cpad, T), 1)
    real = cls_t < n_cls                                        # mask out padded rows

    # ---- SequenceLabeler decoder: masked token cross-entropy, summed --------
    logits_m = jnp.where(real, logits, NEG)
    mx = jnp.max(logits_m, axis=1, keepdims=True)               # (Bt, 1, T)
    lse = jnp.log(jnp.sum(jnp.exp(logits_m - mx), axis=1, keepdims=True)) + mx
    tgt_logit = jnp.sum(jnp.where(cls_t == tgt, logits, 0.0), axis=1, keepdims=True)
    ce = lse - tgt_logit                                        # (Bt, 1, T)
    loss_sum = jnp.sum(ce * mask)
    mask_sum = jnp.sum(mask)

    # ---- sep-O loss (sep_o_type == 'max'); mean taken in the wrapper --------
    mean_l = jnp.sum(logits, axis=1, keepdims=True) * (1.0 / n_cls)   # pad rows are 0
    o_logit = jnp.sum(jnp.where(cls_t == 0, logits, 0.0),
                      axis=1, keepdims=True) - mean_l           # (Bt, 1, T)
    max_non_o = jnp.max(jnp.where((cls_t >= 1) & real, logits - mean_l, NEG),
                        axis=1, keepdims=True)                  # (Bt, 1, T)
    # binary_logits = [O_logit, max_non_O]; target column 1 when tgt == 0
    b_mx = jnp.maximum(o_logit, max_non_o)
    b_lse = jnp.log(jnp.exp(o_logit - b_mx) + jnp.exp(max_non_o - b_mx)) + b_mx
    b_tgt_logit = jnp.where(tgt == 0, max_non_o, o_logit)
    sep_sum = jnp.sum(b_lse - b_tgt_logit)

    # ---- pack the per-step scalars into one lane-dense stats row ------------
    lane = lax.broadcasted_iota(jnp.int32, (1, 128), 1)
    stats_ref[0] = (jnp.where(lane == 0, loss_sum, 0.0)
                    + jnp.where(lane == 1, mask_sum, 0.0)
                    + jnp.where(lane == 2, sep_sum, 0.0))


def few_shot_seq_labeler_loss(test_reps, test_output_mask, support_reps,
                              support_output_mask, test_target, support_target,
                              *, block_batch=8):
    """Returns (loss, emission_logits). Mirrors FewShotSeqLabeler.forward.

    block_batch: batches per grid step (Bt).  ~Bt*0.14 MB of double-buffered
    VMEM at these shapes, so 8-32 is safe on every TPU generation; keep
    B // Bt >= 4 on v7x so both TensorCores get >= 2 pipelined steps.
    """
    B, T, D = test_reps.shape
    _, S, L, C = support_target.shape
    N = S * L
    Cnp = C - 1
    assert Cnp >= 2, "sep_o_loss needs at least one non-O tag besides O (C > 2)."
    Cpad = ((Cnp + 7) // 8) * 8          # pad class axis to full sublanes

    # largest Bt <= block_batch that divides B (keeps every grid block full).
    bt = max(1, min(block_batch, B))
    while B % bt:
        bt -= 1
    G = B // bt

    # Layout plumbing in XLA (not compute): flatten support, convert one-hot
    # support targets to int indices (C-x fewer DMA bytes, no wrapper
    # transpose), widen masks/targets to rank-3 so every block satisfies the
    # (8,128)-or-full-dim rule on its last two dims, cast reps to bf16.
    sup_reps = support_reps.reshape(B, N, D).astype(jnp.bfloat16)
    sup_tgt = jnp.argmax(support_target, axis=-1).astype(jnp.int32).reshape(B, 1, N)
    sup_mask = support_output_mask.reshape(B, 1, N).astype(jnp.float32)
    t_reps = test_reps.astype(jnp.bfloat16)
    t_mask = test_output_mask.reshape(B, 1, T).astype(jnp.float32)
    t_tgt = test_target.reshape(B, 1, T).astype(jnp.int32)

    # deterministic "parameter": emission similarity scale (synthetic init)
    scale = 1.0 / math.sqrt(D)

    kernel = partial(_few_shot_seq_labeler_kernel, scale=scale, n_cls=Cnp)
    emission_ct, stats = pl.pallas_call(
        kernel,
        grid=(G,),
        in_specs=[
            pl.BlockSpec((bt, T, D), lambda g: (g, 0, 0)),   # test_reps
            pl.BlockSpec((bt, 1, T), lambda g: (g, 0, 0)),   # test_mask
            pl.BlockSpec((bt, 1, T), lambda g: (g, 0, 0)),   # test_target
            pl.BlockSpec((bt, N, D), lambda g: (g, 0, 0)),   # support_reps
            pl.BlockSpec((bt, 1, N), lambda g: (g, 0, 0)),   # support_mask
            pl.BlockSpec((bt, 1, N), lambda g: (g, 0, 0)),   # support tag indices
        ],
        out_specs=[
            pl.BlockSpec((bt, Cpad, T), lambda g: (g, 0, 0)),  # logits, T on lanes
            pl.BlockSpec((1, 1, 128), lambda g: (g, 0, 0)),    # per-step packed scalars
        ],
        out_shape=[
            jax.ShapeDtypeStruct((B, Cpad, T), jnp.float32),
            jax.ShapeDtypeStruct((G, 1, 128), jnp.float32),
        ],
        compiler_params=pltpu.CompilerParams(
            dimension_semantics=("parallel",)),   # shard batch-blocks across TCs on v7x
    )(t_reps, t_mask, t_tgt, sup_reps, sup_mask, sup_tgt)

    loss_sum = jnp.sum(stats[:, 0, 0])
    mask_sum = jnp.sum(stats[:, 0, 1])
    sep_sum = jnp.sum(stats[:, 0, 2])

    # loss_scale_type == 'batch_mean'
    loss = loss_sum / (mask_sum / B)
    # sep_o_loss: torch CrossEntropyLoss default reduction='mean' over B*T
    loss = loss + sep_sum / (B * T)

    # drop the padded class rows, return module-layout (B, T, Cnp)
    emission = jnp.transpose(emission_ct[:, :Cnp, :], (0, 2, 1))
    return loss, emission


def _reference(test_reps, test_output_mask, support_reps, support_output_mask,
               test_target, support_target):
    """Pure-JAX (f32) reference of the same forward semantics."""
    B, T, D = test_reps.shape
    _, S, L, C = support_target.shape
    scale = 1.0 / math.sqrt(D)
    sup_reps = support_reps.reshape(B, S * L, D)
    sup_mask = support_output_mask.reshape(B, S * L)
    sup_oh = support_target.reshape(B, S * L, C)
    masked_oh = sup_oh * sup_mask[..., None]
    proto = jnp.einsum('bnc,bnd->bcd', masked_oh, sup_reps)
    proto = proto / jnp.maximum(masked_oh.sum(1), 1.0)[..., None]
    emission = scale * jnp.einsum('btd,bcd->btc', test_reps, proto)
    logits = emission[:, :, 1:]
    tgt = jnp.maximum(test_target - 1, 0)
    logp = jax.nn.log_softmax(logits, axis=-1)
    ce = -jnp.take_along_axis(logp, tgt[..., None], axis=-1)[..., 0]
    loss = jnp.sum(ce * test_output_mask)
    loss = loss / (test_output_mask.sum() / B)
    mean_l = jnp.mean(logits, axis=-1, keepdims=True)
    o_l = logits[:, :, 0:1] - mean_l
    non_o = logits[:, :, 1:] - mean_l
    bin_logits = jnp.concatenate([o_l, jnp.max(non_o, -1, keepdims=True)], -1)
    bin_tgt = (tgt == 0).astype(jnp.int32)
    blogp = jax.nn.log_softmax(bin_logits, axis=-1)
    bce = -jnp.take_along_axis(blogp, bin_tgt[..., None], axis=-1)[..., 0]
    loss = loss + jnp.mean(bce)
    return loss, logits


if __name__ == "__main__":
    # Small but lane-friendly shapes: T and D multiples of 128, N = S*L = 128.
    # B=16 with block_batch=8 -> grid of 2 batch-blocks ("parallel").
    B, T, S, L, D, C = 16, 128, 4, 32, 128, 5   # C includes the [PAD] tag
    key = jax.random.PRNGKey(0)
    k1, k2, k3, k4, k5, k6 = jax.random.split(key, 6)

    test_reps = jax.random.normal(k1, (B, T, D), jnp.float32)
    support_reps = jax.random.normal(k2, (B, S, L, D), jnp.float32)
    test_output_mask = (jax.random.uniform(k3, (B, T)) > 0.2).astype(jnp.float32)
    support_output_mask = (jax.random.uniform(k4, (B, S, L)) > 0.2).astype(jnp.float32)
    test_target = jax.random.randint(k5, (B, T), 1, C, dtype=jnp.int32)
    support_target_idx = jax.random.randint(k6, (B, S, L), 1, C, dtype=jnp.int32)
    support_target = jax.nn.one_hot(support_target_idx, C, dtype=jnp.float32)

    loss, emission = few_shot_seq_labeler_loss(
        test_reps, test_output_mask, support_reps, support_output_mask,
        test_target, support_target, block_batch=8)
    jax.block_until_ready((loss, emission))

    ref_loss, ref_emission = _reference(
        test_reps, test_output_mask, support_reps, support_output_mask,
        test_target, support_target)

    # Kernel feeds the MXU bf16 operands (f32 accumulation); tolerances account
    # for bf16 rounding versus the pure-f32 reference.
    assert jnp.allclose(emission, ref_emission, atol=5e-2, rtol=5e-2), "emission mismatch"
    assert abs(float(loss) - float(ref_loss)) < 5e-2, (float(loss), float(ref_loss))

    print("KERNEL_OK")
</pallas_src>

<mosaic_0001>
module attributes {stable_mosaic.version = 11 : i64} {
  func.func @_few_shot_seq_labeler_kernel(%arg0: i32, %arg1: memref<8x128x128xbf16, #tpu.memory_space<vmem>>, %arg2: memref<8x1x128xf32, #tpu.memory_space<vmem>>, %arg3: memref<8x1x128xi32, #tpu.memory_space<vmem>>, %arg4: memref<8x128x128xbf16, #tpu.memory_space<vmem>>, %arg5: memref<8x1x128xf32, #tpu.memory_space<vmem>>, %arg6: memref<8x1x128xi32, #tpu.memory_space<vmem>>, %arg7: memref<8x8x128xf32, #tpu.memory_space<vmem>>, %arg8: memref<1x1x128xf32, #tpu.memory_space<vmem>>) attributes {dimension_semantics = [#tpu.dimension_semantics<parallel>], iteration_bounds = array<i64: 2>, scalar_prefetch = 0 : i64, scratch_operands = 0 : i64, tpu.core_type = #tpu.core_type<tc>, window_params = [{transform_indices = @transform_0, window_bounds = array<i64: 8, 128, 128>}, {transform_indices = @transform_1, window_bounds = array<i64: 8, 1, 128>}, {transform_indices = @transform_2, window_bounds = array<i64: 8, 1, 128>}, {transform_indices = @transform_3, window_bounds = array<i64: 8, 128, 128>}, {transform_indices = @transform_4, window_bounds = array<i64: 8, 1, 128>}, {transform_indices = @transform_5, window_bounds = array<i64: 8, 1, 128>}, {transform_indices = @transform_6, window_bounds = array<i64: 8, 8, 128>}, {transform_indices = @transform_7, window_bounds = array<i64: 1, 1, 128>}]} {
    %0 = tpu.iota {dimensions = array<i32: 1>} : vector<8x8x128xi32>
    %c1_i32 = arith.constant 1 : i32
    %1 = vector.broadcast %c1_i32 : i32 to vector<8x8x128xi32>
    %2 = arith.addi %0, %1 : vector<8x8x128xi32>
    %c0 = arith.constant 0 : index
    %c0_0 = arith.constant 0 : index
    %c0_1 = arith.constant 0 : index
    %3 = vector.load %arg6[%c0, %c0_0, %c0_1] : memref<8x1x128xi32, #tpu.memory_space<vmem>>, vector<8x1x128xi32>
    %4 = vector.broadcast %3 : vector<8x1x128xi32> to vector<8x8x128xi32>
    %5 = arith.cmpi eq, %2, %4 : vector<8x8x128xi32>
    %c0_2 = arith.constant 0 : index
    %c0_3 = arith.constant 0 : index
    %c0_4 = arith.constant 0 : index
    %6 = vector.load %arg5[%c0_2, %c0_3, %c0_4] : memref<8x1x128xf32, #tpu.memory_space<vmem>>, vector<8x1x128xf32>
    %cst = arith.constant 0.000000e+00 : f32
    %7 = vector.shape_cast %6 : vector<8x1x128xf32> to vector<8x1x128xf32>
    %8 = vector.broadcast %7 : vector<8x1x128xf32> to vector<8x8x128xf32>
    %9 = vector.broadcast %cst : f32 to vector<8x8x128xf32>
    %10 = arith.select %5, %8, %9 : vector<8x8x128xi1>, vector<8x8x128xf32>
    %cst_5 = arith.constant dense<0.000000e+00> : vector<8x8xf32>
    %11 = vector.multi_reduction <add>, %10, %cst_5 [2] : vector<8x8x128xf32> to vector<8x8xf32>
    %12 = vector.shape_cast %11 : vector<8x8xf32> to vector<8x8x1xf32>
    %13 = arith.truncf %10 : vector<8x8x128xf32> to vector<8x8x128xbf16>
    %c0_6 = arith.constant 0 : index
    %c0_7 = arith.constant 0 : index
    %c0_8 = arith.constant 0 : index
    %14 = vector.load %arg4[%c0_6, %c0_7, %c0_8] : memref<8x128x128xbf16, #tpu.memory_space<vmem>>, vector<8x128x128xbf16>
    "tpu.trace_start"() <{level = 10 : i32, message = "bcn,bnd->bcd"}> : () -> ()
    %cst_9 = arith.constant dense<0.000000e+00> : vector<8x8x128xf32>
    %15 = tpu.matmul %13, %14, %cst_9 {dimension_numbers = #tpu.dot_dimension_numbers<[2], [1], [1], [2], [0, 0, 0, 1, 1, 2], [0], [0]>} : vector<8x8x128xbf16>, vector<8x128x128xbf16>, vector<8x8x128xf32> -> vector<8x8x128xf32>
    "tpu.trace_stop"() : () -> ()
    %cst_10 = arith.constant 1.000000e+00 : f32
    %16 = vector.broadcast %cst_10 : f32 to vector<8x8x1xf32>
    %17 = arith.maximumf %12, %16 : vector<8x8x1xf32>
    %cst_11 = arith.constant 0.0883883461 : f32
    %18 = vector.broadcast %cst_11 : f32 to vector<8x8x1xf32>
    %19 = arith.divf %18, %17 : vector<8x8x1xf32>
    %20 = vector.broadcast %19 : vector<8x8x1xf32> to vector<8x8x128xf32>
    %21 = arith.mulf %15, %20 : vector<8x8x128xf32>
    %22 = arith.truncf %21 : vector<8x8x128xf32> to vector<8x8x128xbf16>
    %c0_12 = arith.constant 0 : index
    %c0_13 = arith.constant 0 : index
    %c0_14 = arith.constant 0 : index
    %23 = vector.load %arg1[%c0_12, %c0_13, %c0_14] : memref<8x128x128xbf16, #tpu.memory_space<vmem>>, vector<8x128x128xbf16>
    "tpu.trace_start"() <{level = 10 : i32, message = "bcd,btd->bct"}> : () -> ()
    %cst_15 = arith.constant dense<0.000000e+00> : vector<8x8x128xf32>
    %24 = tpu.matmul %22, %23, %cst_15 {dimension_numbers = #tpu.dot_dimension_numbers<[2], [2], [1], [1], [0, 0, 0, 1, 1, 1], [0], [0]>} : vector<8x8x128xbf16>, vector<8x128x128xbf16>, vector<8x8x128xf32> -> vector<8x8x128xf32>
    "tpu.trace_stop"() : () -> ()
    %c0_16 = arith.constant 0 : index
    %c0_17 = arith.constant 0 : index
    %c0_18 = arith.constant 0 : index
    %25 = vector.load %arg7[%c0_16, %c0_17, %c0_18] : memref<8x8x128xf32, #tpu.memory_space<vmem>>, vector<8x8x128xf32>
    tpu.vector_store %arg7[%c0_16, %c0_17, %c0_18], %24 {strides = array<i32>} : memref<8x8x128xf32, #tpu.memory_space<vmem>>, vector<8x8x128xf32>,
    %c0_19 = arith.constant 0 : index
    %c0_20 = arith.constant 0 : index
    %c0_21 = arith.constant 0 : index
    %26 = vector.load %arg3[%c0_19, %c0_20, %c0_21] : memref<8x1x128xi32, #tpu.memory_space<vmem>>, vector<8x1x128xi32>
    %c1_i32_22 = arith.constant 1 : i32
    %27 = vector.broadcast %c1_i32_22 : i32 to vector<8x1x128xi32>
    %28 = arith.subi %26, %27 : vector<8x1x128xi32>
    %c0_i32 = arith.constant 0 : i32
    %29 = vector.broadcast %c0_i32 : i32 to vector<8x1x128xi32>
    %30 = arith.maxsi %28, %29 : vector<8x1x128xi32>
    %c0_23 = arith.constant 0 : index
    %c0_24 = arith.constant 0 : index
    %c0_25 = arith.constant 0 : index
    %31 = vector.load %arg2[%c0_23, %c0_24, %c0_25] : memref<8x1x128xf32, #tpu.memory_space<vmem>>, vector<8x1x128xf32>
    %32 = tpu.iota {dimensions = array<i32: 1>} : vector<8x8x128xi32>
    %c4_i32 = arith.constant 4 : i32
    %33 = vector.broadcast %c4_i32 : i32 to vector<8x8x128xi32>
    %34 = arith.cmpi slt, %32, %33 : vector<8x8x128xi32>
    %cst_26 = arith.constant -1.000000e+30 : f32
    %35 = vector.broadcast %cst_26 : f32 to vector<8x8x128xf32>
    %36 = arith.select %34, %24, %35 : vector<8x8x128xi1>, vector<8x8x128xf32>
    %cst_27 = arith.constant dense<0xFF800000> : vector<8x128xf32>
    %37 = vector.multi_reduction <maximumf>, %36, %cst_27 [1] : vector<8x8x128xf32> to vector<8x128xf32>
    %38 = vector.shape_cast %37 : vector<8x128xf32> to vector<8x1x128xf32>
    %39 = vector.broadcast %38 : vector<8x1x128xf32> to vector<8x8x128xf32>
    %40 = arith.subf %36, %39 : vector<8x8x128xf32>
    %41 = math.exp %40 : vector<8x8x128xf32>
    %cst_28 = arith.constant dense<0.000000e+00> : vector<8x128xf32>
    %42 = vector.multi_reduction <add>, %41, %cst_28 [1] : vector<8x8x128xf32> to vector<8x128xf32>
    %43 = vector.shape_cast %42 : vector<8x128xf32> to vector<8x1x128xf32>
    %44 = math.log %43 : vector<8x1x128xf32>
    %45 = arith.addf %44, %38 : vector<8x1x128xf32>
    %46 = vector.broadcast %30 : vector<8x1x128xi32> to vector<8x8x128xi32>
    %47 = arith.cmpi eq, %32, %46 : vector<8x8x128xi32>
    %cst_29 = arith.constant 0.000000e+00 : f32
    %48 = vector.broadcast %cst_29 : f32 to vector<8x8x128xf32>
    %49 = arith.select %47, %24, %48 : vector<8x8x128xi1>, vector<8x8x128xf32>
    %cst_30 = arith.constant dense<0.000000e+00> : vector<8x128xf32>
    %50 = vector.multi_reduction <add>, %49, %cst_30 [1] : vector<8x8x128xf32> to vector<8x128xf32>
    %51 = vector.shape_cast %50 : vector<8x128xf32> to vector<8x1x128xf32>
    %52 = arith.subf %45, %51 : vector<8x1x128xf32>
    %53 = arith.mulf %52, %31 : vector<8x1x128xf32>
    %54 = vector.shape_cast %53 : vector<8x1x128xf32> to vector<1x8x1x128xf32>
    %cst_31 = arith.constant dense<0.000000e+00> : vector<1xf32>
    %55 = vector.multi_reduction <add>, %54, %cst_31 [1, 2, 3] : vector<1x8x1x128xf32> to vector<1xf32>
    %56 = vector.shape_cast %55 : vector<1xf32> to vector<1x1x1x1xf32>
    %57 = vector.extract %56[0, 0, 0, 0] : f32 from vector<1x1x1x1xf32>
    %58 = vector.shape_cast %31 : vector<8x1x128xf32> to vector<1x8x1x128xf32>
    %cst_32 = arith.constant dense<0.000000e+00> : vector<1xf32>
    %59 = vector.multi_reduction <add>, %58, %cst_32 [1, 2, 3] : vector<1x8x1x128xf32> to vector<1xf32>
    %60 = vector.shape_cast %59 : vector<1xf32> to vector<1x1x1x1xf32>
    %61 = vector.extract %60[0, 0, 0, 0] : f32 from vector<1x1x1x1xf32>
    %cst_33 = arith.constant dense<0.000000e+00> : vector<8x128xf32>
    %62 = vector.multi_reduction <add>, %24, %cst_33 [1] : vector<8x8x128xf32> to vector<8x128xf32>
    %63 = vector.shape_cast %62 : vector<8x128xf32> to vector<8x1x128xf32>
    %cst_34 = arith.constant 2.500000e-01 : f32
    %64 = vector.broadcast %cst_34 : f32 to vector<8x1x128xf32>
    %65 = arith.mulf %63, %64 : vector<8x1x128xf32>
    %c0_i32_35 = arith.constant 0 : i32
    %66 = vector.broadcast %c0_i32_35 : i32 to vector<8x8x128xi32>
    %67 = arith.cmpi eq, %32, %66 : vector<8x8x128xi32>
    %cst_36 = arith.constant 0.000000e+00 : f32
    %68 = vector.broadcast %cst_36 : f32 to vector<8x8x128xf32>
    %69 = arith.select %67, %24, %68 : vector<8x8x128xi1>, vector<8x8x128xf32>
    %cst_37 = arith.constant dense<0.000000e+00> : vector<8x128xf32>
    %70 = vector.multi_reduction <add>, %69, %cst_37 [1] : vector<8x8x128xf32> to vector<8x128xf32>
    %71 = vector.shape_cast %70 : vector<8x128xf32> to vector<8x1x128xf32>
    %72 = arith.subf %71, %65 : vector<8x1x128xf32>
    %c1_i32_38 = arith.constant 1 : i32
    %73 = vector.broadcast %c1_i32_38 : i32 to vector<8x8x128xi32>
    %74 = arith.cmpi sge, %32, %73 : vector<8x8x128xi32>
    %75 = arith.andi %74, %34 : vector<8x8x128xi1>
    %76 = vector.broadcast %65 : vector<8x1x128xf32> to vector<8x8x128xf32>
    %77 = arith.subf %24, %76 : vector<8x8x128xf32>
    %cst_39 = arith.constant -1.000000e+30 : f32
    %78 = vector.broadcast %cst_39 : f32 to vector<8x8x128xf32>
    %79 = arith.select %75, %77, %78 : vector<8x8x128xi1>, vector<8x8x128xf32>
    %cst_40 = arith.constant dense<0xFF800000> : vector<8x128xf32>
    %80 = vector.multi_reduction <maximumf>, %79, %cst_40 [1] : vector<8x8x128xf32> to vector<8x128xf32>
    %81 = vector.shape_cast %80 : vector<8x128xf32> to vector<8x1x128xf32>
    %82 = arith.maximumf %72, %81 : vector<8x1x128xf32>
    %83 = arith.subf %72, %82 : vector<8x1x128xf32>
    %84 = math.exp %83 : vector<8x1x128xf32>
    %85 = arith.subf %81, %82 : vector<8x1x128xf32>
    %86 = math.exp %85 : vector<8x1x128xf32>
    %87 = arith.addf %84, %86 : vector<8x1x128xf32>
    %88 = math.log %87 : vector<8x1x128xf32>
    %89 = arith.addf %88, %82 : vector<8x1x128xf32>
    %c0_i32_41 = arith.constant 0 : i32
    %90 = vector.broadcast %c0_i32_41 : i32 to vector<8x1x128xi32>
    %91 = arith.cmpi eq, %30, %90 : vector<8x1x128xi32>
    %92 = arith.select %91, %81, %72 : vector<8x1x128xi1>, vector<8x1x128xf32>
    %93 = arith.subf %89, %92 : vector<8x1x128xf32>
    %94 = vector.shape_cast %93 : vector<8x1x128xf32> to vector<1x8x1x128xf32>
    %cst_42 = arith.constant dense<0.000000e+00> : vector<1xf32>
    %95 = vector.multi_reduction <add>, %94, %cst_42 [1, 2, 3] : vector<1x8x1x128xf32> to vector<1xf32>
    %96 = vector.shape_cast %95 : vector<1xf32> to vector<1x1x1x1xf32>
    %97 = vector.extract %96[0, 0, 0, 0] : f32 from vector<1x1x1x1xf32>
    %98 = tpu.iota {dimensions = array<i32: 1>} : vector<1x128xi32>
    %c0_i32_43 = arith.constant 0 : i32
    %99 = vector.broadcast %c0_i32_43 : i32 to vector<1x128xi32>
    %100 = arith.cmpi eq, %98, %99 : vector<1x128xi32>
    %cst_44 = arith.constant 0.000000e+00 : f32
    %101 = vector.broadcast %57 : f32 to vector<1x128xf32>
    %102 = vector.broadcast %cst_44 : f32 to vector<1x128xf32>
    %103 = arith.select %100, %101, %102 : vector<1x128xi1>, vector<1x128xf32>
    %c1_i32_45 = arith.constant 1 : i32
    %104 = vector.broadcast %c1_i32_45 : i32 to vector<1x128xi32>
    %105 = arith.cmpi eq, %98, %104 : vector<1x128xi32>
    %cst_46 = arith.constant 0.000000e+00 : f32
    %106 = vector.broadcast %61 : f32 to vector<1x128xf32>
    %107 = vector.broadcast %cst_46 : f32 to vector<1x128xf32>
    %108 = arith.select %105, %106, %107 : vector<1x128xi1>, vector<1x128xf32>
    %109 = arith.addf %103, %108 : vector<1x128xf32>
    %c2_i32 = arith.constant 2 : i32
    %110 = vector.broadcast %c2_i32 : i32 to vector<1x128xi32>
    %111 = arith.cmpi eq, %98, %110 : vector<1x128xi32>
    %cst_47 = arith.constant 0.000000e+00 : f32
    %112 = vector.broadcast %97 : f32 to vector<1x128xf32>
    %113 = vector.broadcast %cst_47 : f32 to vector<1x128xf32>
    %114 = arith.select %111, %112, %113 : vector<1x128xi1>, vector<1x128xf32>
    %115 = arith.addf %109, %114 : vector<1x128xf32>
    %c0_48 = arith.constant 0 : index
    %c0_49 = arith.constant 0 : index
    %c0_50 = arith.constant 0 : index
    %116 = vector.load %arg8[%c0_48, %c0_49, %c0_50] : memref<1x1x128xf32, #tpu.memory_space<vmem>>, vector<1x1x128xf32>
    %117 = vector.shape_cast %116 : vector<1x1x128xf32> to vector<1x128xf32>
    %118 = vector.shape_cast %115 : vector<1x128xf32> to vector<1x1x128xf32>
    tpu.vector_store %arg8[%c0_48, %c0_49, %c0_50], %118 {strides = array<i32>} : memref<1x1x128xf32, #tpu.memory_space<vmem>>, vector<1x1x128xf32>,
    return
  }
  func.func @transform_0(%arg0: i32) -> (i32, i32, i32) {
    %c0_i32 = arith.constant 0 : i32
    %c0_i32_0 = arith.constant 0 : i32
    %c0_i32_1 = arith.constant 0 : i32
    return %arg0, %c0_i32, %c0_i32_0 : i32, i32, i32
  }
  func.func @transform_1(%arg0: i32) -> (i32, i32, i32) {
    %c0_i32 = arith.constant 0 : i32
    %c0_i32_0 = arith.constant 0 : i32
    %c0_i32_1 = arith.constant 0 : i32
    return %arg0, %c0_i32, %c0_i32_0 : i32, i32, i32
  }
  func.func @transform_2(%arg0: i32) -> (i32, i32, i32) {
    %c0_i32 = arith.constant 0 : i32
    %c0_i32_0 = arith.constant 0 : i32
    %c0_i32_1 = arith.constant 0 : i32
    return %arg0, %c0_i32, %c0_i32_0 : i32, i32, i32
  }
  func.func @transform_3(%arg0: i32) -> (i32, i32, i32) {
    %c0_i32 = arith.constant 0 : i32
    %c0_i32_0 = arith.constant 0 : i32
    %c0_i32_1 = arith.constant 0 : i32
    return %arg0, %c0_i32, %c0_i32_0 : i32, i32, i32
  }
  func.func @transform_4(%arg0: i32) -> (i32, i32, i32) {
    %c0_i32 = arith.constant 0 : i32
    %c0_i32_0 = arith.constant 0 : i32
    %c0_i32_1 = arith.constant 0 : i32
    return %arg0, %c0_i32, %c0_i32_0 : i32, i32, i32
  }
  func.func @transform_5(%arg0: i32) -> (i32, i32, i32) {
    %c0_i32 = arith.constant 0 : i32
    %c0_i32_0 = arith.constant 0 : i32
    %c0_i32_1 = arith.constant 0 : i32
    return %arg0, %c0_i32, %c0_i32_0 : i32, i32, i32
  }
  func.func @transform_6(%arg0: i32) -> (i32, i32, i32) {
    %c0_i32 = arith.constant 0 : i32
    %c0_i32_0 = arith.constant 0 : i32
    %c0_i32_1 = arith.constant 0 : i32
    return %arg0, %c0_i32, %c0_i32_0 : i32, i32, i32
  }
  func.func @transform_7(%arg0: i32) -> (i32, i32, i32) {
    %c0_i32 = arith.constant 0 : i32
    %c0_i32_0 = arith.constant 0 : i32
    %c0_i32_1 = arith.constant 0 : i32
    return %arg0, %c0_i32, %c0_i32_0 : i32, i32, i32
  }
}

</mosaic_0001>

<llo_original>
// kernel: tpu_custom_call.1
$region0: #{tpu_custom_call.1}
  #allocation0 [shape = 'u32[]', space=smem, size = 0x4, offset = 0x4, fixed_abs, tag = 'smem constant byte address 0x4 - core index']
  #allocation1 [shape = 'u32[144,128]{1,0:T(1,128)}', space=vmem, size = 0x12000, scoped, tag = 'internal scratch']
  %s0 = inlined_call_operand.hbm [shape: bf16[16,128,128], index: 0, kind: input, shape index: {}]
  %s1 = inlined_call_operand.hbm [shape: f32[16,1,128], index: 1, kind: input, shape index: {}]
  %s2 = inlined_call_operand.hbm [shape: s32[16,1,128], index: 2, kind: input, shape index: {}]
  %s3 = inlined_call_operand.hbm [shape: bf16[16,128,128], index: 3, kind: input, shape index: {}]
  %s4 = inlined_call_operand.hbm [shape: f32[16,1,128], index: 4, kind: input, shape index: {}]
  %s5 = inlined_call_operand.vmem [shape: s32[16,1,128], index: 5, kind: input, shape index: {}]
  %s6 = inlined_call_operand.hbm [shape: f32[16,8,128], index: 6, kind: output, shape index: {0}]
  %s7 = inlined_call_operand.hbm [shape: f32[2,1,128], index: 7, kind: output, shape index: {1}]
  %8 = xla_tuple %s6, %s7
  %s9 = sld [smem:[#allocation0]]
  $region85: #{tpu_custom_call.1} parent=0
    _
  %s11 = ssub.s32 1, %s9
  %s12 = scalar_select 0, %s11, %s9
  $region1: #{tpu_custom_call.1} parent=0
    #allocation2 [shape = 'u8[524288]{0}', space=vmem, size = 0x80000, scoped, tag = 'input window, operand 0']
    #allocation3 [shape = 's32[2]{0}', space=sflag, size = 0x8, scoped, tag = 'scoped memory for tpu_custom_call.1']
    #allocation4 [shape = 's32[2]{0}', space=sflag, size = 0x8, scoped, tag = 'scoped memory for tpu_custom_call.1']
    #allocation5 [shape = 'u8[8192]{0}', space=vmem, size = 0x2000, scoped, tag = 'input window, operand 1']
    #allocation6 [shape = 's32[2]{0}', space=sflag, size = 0x8, scoped, tag = 'scoped memory for tpu_custom_call.1']
    #allocation7 [shape = 'u8[8192]{0}', space=vmem, size = 0x2000, scoped, tag = 'input window, operand 2']
    #allocation8 [shape = 'u8[524288]{0}', space=vmem, size = 0x80000, scoped, tag = 'input window, operand 3']
    #allocation9 [shape = 's32[2]{0}', space=sflag, size = 0x8, scoped, tag = 'scoped memory for tpu_custom_call.1']
    #allocation10 [shape = 'u8[8192]{0}', space=vmem, size = 0x2000, scoped, tag = 'input window, operand 4']
    #allocation11 [shape = 'u8[65536]{0}', space=vmem, size = 0x10000, scoped, tag = 'output window, operand 0']
    #allocation12 [shape = 'u8[1024]{0}', space=vmem, size = 0x400, scoped, tag = 'output window, operand 1']
    #allocation13 [shape = 's32[2]{0}', space=sflag, size = 0x8, scoped, tag = 'scoped memory for tpu_custom_call.1']
    %13 = vsyncpa [#allocation3], 0
    %s14 = scalar_lea.sflag [#allocation3], 1
    %15 = vsyncpa %s14, 0
    %16 = vsyncpa [#allocation6], 0
    %s17 = scalar_lea.sflag [#allocation6], 1
    %18 = vsyncpa %s17, 0
    %19 = vsyncpa [#allocation9], 0
    %s20 = scalar_lea.sflag [#allocation9], 1
    %21 = vsyncpa %s20, 0
    %22 = vsyncpa [#allocation4], 0
    %s23 = scalar_lea.sflag [#allocation4], 1
    %24 = vsyncpa %s23, 0
    %25 = vsyncpa [#allocation13], 0
    %s26 = scalar_lea.sflag [#allocation13], 1
    %27 = vsyncpa %s26, 0
    loop: start=0, step=1, limit=4
    $region2: #{tpu_custom_call.1} parent=1 // loop_pre_header
      _
    $region3: #{tpu_custom_call.1} parent=1 // loop_header
      %s29 = sphi 0, %s33
      %p30 = scmp.ge.s32.totalorder %s29, 4
      %s39 = sphi 0, %s41
      %s42 = sphi 0, %s39
      %s43 = sphi 0, %s42
      %s59 = sphi 0, %s43
      %s65 = sphi 0, %s67
      %s68 = sphi 0, %s65
      %s69 = sphi 0, %s68
      %s85 = sphi 0, %s69
      %s91 = sphi 0, %s93
      %s94 = sphi 0, %s91
      %s95 = sphi 0, %s94
      %s111 = sphi 0, %s95
      %s117 = sphi 0, %s119
      %s120 = sphi 0, %s117
      %s121 = sphi 0, %s120
      %s137 = sphi 0, %s121
      %s143 = sphi 0, %s145
      %s146 = sphi 0, %s143
      %s147 = sphi 0, %s146
      %s163 = sphi 0, %s147
      %s169 = sphi 0, %s171
      %s172 = sphi 0, %s169
      %s173 = sphi 0, %s172
      %s189 = sphi 0, %s173
      %s195 = sphi 0, %s197
      %s198 = sphi 0, %s195
      %s199 = sphi 0, %s198
      %s215 = sphi 0, %s199
      %s221 = sphi 0, %s223
      %s224 = sphi 0, %s221
      %s225 = sphi 0, %s224
      %s241 = sphi 0, %s225
    $region4: #{tpu_custom_call.1} parent=1 // loop_header_branch
      %32 = sbr.rel (%p30) target = $region8
    $region5: #{tpu_custom_call.1} parent=1 // loop_body
      %s34 = ssub.s32 %s29, 1
      %s35 = ssub.s32 %s29, 2
      %s36 = sadd.s32 %s29, 1
      %s37 = ssub.s32 %s29, %s36
      %p38 = scmp.eq.s32.totalorder %s37, 0
      %s40 = sadd.s32 %s39, 1
      %s41 = scalar_select %p38, %s39, %s40
      %p44 = pneg %p38
      %p45 = scmp.eq.s32.totalorder %s29, 1
      %p46 = por %p44, %p45
      %p47 = scmp.ne.s32.totalorder %s39, %s42
      %p48 = scmp.eq.s32.totalorder %s29, 0
      %p49 = por %p47, %p48
      %p50 = scmp.ne.s32.totalorder %s39, %s42
      %p51 = scmp.eq.s32.totalorder %s34, 1
      %p52 = por %p50, %p51
      %p53 = scmp.ne.s32.totalorder %s42, %s43
      %p54 = scmp.eq.s32.totalorder %s34, 0
      %p55 = por %p53, %p54
      %p56 = scmp.ne.s32.totalorder %s42, %s43
      %p57 = scmp.eq.s32.totalorder %s35, 1
      %p58 = por %p56, %p57
      %p60 = scmp.ne.s32.totalorder %s43, %s59
      %p61 = scmp.eq.s32.totalorder %s35, 0
      %p62 = por %p60, %p61
      %s63 = ssub.s32 %s29, %s36
      %p64 = scmp.eq.s32.totalorder %s63, 0
      %s66 = sadd.s32 %s65, 1
      %s67 = scalar_select %p64, %s65, %s66
      %p70 = pneg %p64
      %p71 = scmp.eq.s32.totalorder %s29, 1
      %p72 = por %p70, %p71
      %p73 = scmp.ne.s32.totalorder %s65, %s68
      %p74 = scmp.eq.s32.totalorder %s29, 0
      %p75 = por %p73, %p74
      %p76 = scmp.ne.s32.totalorder %s65, %s68
      %p77 = scmp.eq.s32.totalorder %s34, 1
      %p78 = por %p76, %p77
      %p79 = scmp.ne.s32.totalorder %s68, %s69
      %p80 = scmp.eq.s32.totalorder %s34, 0
      %p81 = por %p79, %p80
      %p82 = scmp.ne.s32.totalorder %s68, %s69
      %p83 = scmp.eq.s32.totalorder %s35, 1
      %p84 = por %p82, %p83
      %p86 = scmp.ne.s32.totalorder %s69, %s85
      %p87 = scmp.eq.s32.totalorder %s35, 0
      %p88 = por %p86, %p87
      %s89 = ssub.s32 %s29, %s36
      %p90 = scmp.eq.s32.totalorder %s89, 0
      %s92 = sadd.s32 %s91, 1
      %s93 = scalar_select %p90, %s91, %s92
      %p96 = pneg %p90
      %p97 = scmp.eq.s32.totalorder %s29, 1
      %p98 = por %p96, %p97
      %p99 = scmp.ne.s32.totalorder %s91, %s94
      %p100 = scmp.eq.s32.totalorder %s29, 0
      %p101 = por %p99, %p100
      %p102 = scmp.ne.s32.totalorder %s91, %s94
      %p103 = scmp.eq.s32.totalorder %s34, 1
      %p104 = por %p102, %p103
      %p105 = scmp.ne.s32.totalorder %s94, %s95
      %p106 = scmp.eq.s32.totalorder %s34, 0
      %p107 = por %p105, %p106
      %p108 = scmp.ne.s32.totalorder %s94, %s95
      %p109 = scmp.eq.s32.totalorder %s35, 1
      %p110 = por %p108, %p109
      %p112 = scmp.ne.s32.totalorder %s95, %s111
      %p113 = scmp.eq.s32.totalorder %s35, 0
      %p114 = por %p112, %p113
      %s115 = ssub.s32 %s29, %s36
      %p116 = scmp.eq.s32.totalorder %s115, 0
      %s118 = sadd.s32 %s117, 1
      %s119 = scalar_select %p116, %s117, %s118
      %p122 = pneg %p116
      %p123 = scmp.eq.s32.totalorder %s29, 1
      %p124 = por %p122, %p123
      %p125 = scmp.ne.s32.totalorder %s117, %s120
      %p126 = scmp.eq.s32.totalorder %s29, 0
      %p127 = por %p125, %p126
      %p128 = scmp.ne.s32.totalorder %s117, %s120
      %p129 = scmp.eq.s32.totalorder %s34, 1
      %p130 = por %p128, %p129
      %p131 = scmp.ne.s32.totalorder %s120, %s121
      %p132 = scmp.eq.s32.totalorder %s34, 0
      %p133 = por %p131, %p132
      %p134 = scmp.ne.s32.totalorder %s120, %s121
      %p135 = scmp.eq.s32.totalorder %s35, 1
      %p136 = por %p134, %p135
      %p138 = scmp.ne.s32.totalorder %s121, %s137
      %p139 = scmp.eq.s32.totalorder %s35, 0
      %p140 = por %p138, %p139
      %s141 = ssub.s32 %s29, %s36
      %p142 = scmp.eq.s32.totalorder %s141, 0
      %s144 = sadd.s32 %s143, 1
      %s145 = scalar_select %p142, %s143, %s144
      %p148 = pneg %p142
      %p149 = scmp.eq.s32.totalorder %s29, 1
      %p150 = por %p148, %p149
      %p151 = scmp.ne.s32.totalorder %s143, %s146
      %p152 = scmp.eq.s32.totalorder %s29, 0
      %p153 = por %p151, %p152
      %p154 = scmp.ne.s32.totalorder %s143, %s146
      %p155 = scmp.eq.s32.totalorder %s34, 1
      %p156 = por %p154, %p155
      %p157 = scmp.ne.s32.totalorder %s146, %s147
      %p158 = scmp.eq.s32.totalorder %s34, 0
      %p159 = por %p157, %p158
      %p160 = scmp.ne.s32.totalorder %s146, %s147
      %p161 = scmp.eq.s32.totalorder %s35, 1
      %p162 = por %p160, %p161
      %p164 = scmp.ne.s32.totalorder %s147, %s163
      %p165 = scmp.eq.s32.totalorder %s35, 0
      %p166 = por %p164, %p165
      %s167 = ssub.s32 %s29, %s36
      %p168 = scmp.eq.s32.totalorder %s167, 0
      %s170 = sadd.s32 %s169, 1
      %s171 = scalar_select %p168, %s169, %s170
      %p174 = pneg %p168
      %p175 = scmp.eq.s32.totalorder %s29, 1
      %p176 = por %p174, %p175
      %p177 = scmp.ne.s32.totalorder %s169, %s172
      %p178 = scmp.eq.s32.totalorder %s29, 0
      %p179 = por %p177, %p178
      %p180 = scmp.ne.s32.totalorder %s169, %s172
      %p181 = scmp.eq.s32.totalorder %s34, 1
      %p182 = por %p180, %p181
      %p183 = scmp.ne.s32.totalorder %s172, %s173
      %p184 = scmp.eq.s32.totalorder %s34, 0
      %p185 = por %p183, %p184
      %p186 = scmp.ne.s32.totalorder %s172, %s173
      %p187 = scmp.eq.s32.totalorder %s35, 1
      %p188 = por %p186, %p187
      %p190 = scmp.ne.s32.totalorder %s173, %s189
      %p191 = scmp.eq.s32.totalorder %s35, 0
      %p192 = por %p190, %p191
      %s193 = ssub.s32 %s29, %s36
      %p194 = scmp.eq.s32.totalorder %s193, 0
      %s196 = sadd.s32 %s195, 1
      %s197 = scalar_select %p194, %s195, %s196
      %p200 = pneg %p194
      %p201 = scmp.eq.s32.totalorder %s29, 1
      %p202 = por %p200, %p201
      %p203 = scmp.ne.s32.totalorder %s195, %s198
      %p204 = scmp.eq.s32.totalorder %s29, 0
      %p205 = por %p203, %p204
      %p206 = scmp.ne.s32.totalorder %s195, %s198
      %p207 = scmp.eq.s32.totalorder %s34, 1
      %p208 = por %p206, %p207
      %p209 = scmp.ne.s32.totalorder %s198, %s199
      %p210 = scmp.eq.s32.totalorder %s34, 0
      %p211 = por %p209, %p210
      %p212 = scmp.ne.s32.totalorder %s198, %s199
      %p213 = scmp.eq.s32.totalorder %s35, 1
      %p214 = por %p212, %p213
      %p216 = scmp.ne.s32.totalorder %s199, %s215
      %p217 = scmp.eq.s32.totalorder %s35, 0
      %p218 = por %p216, %p217
      %s219 = ssub.s32 %s29, %s36
      %p220 = scmp.eq.s32.totalorder %s219, 0
      %s222 = sadd.s32 %s221, 1
      %s223 = scalar_select %p220, %s221, %s222
      %p226 = pneg %p220
      %p227 = scmp.eq.s32.totalorder %s29, 1
      %p228 = por %p226, %p227
      %p229 = scmp.ne.s32.totalorder %s221, %s224
      %p230 = scmp.eq.s32.totalorder %s29, 0
      %p231 = por %p229, %p230
      %p232 = scmp.ne.s32.totalorder %s221, %s224
      %p233 = scmp.eq.s32.totalorder %s34, 1
      %p234 = por %p232, %p233
      %p235 = scmp.ne.s32.totalorder %s224, %s225
      %p236 = scmp.eq.s32.totalorder %s34, 0
      %p237 = por %p235, %p236
      %p238 = scmp.ne.s32.totalorder %s224, %s225
      %p239 = scmp.eq.s32.totalorder %s35, 1
      %p240 = por %p238, %p239
      %p242 = scmp.ne.s32.totalorder %s225, %s241
      %p243 = scmp.eq.s32.totalorder %s35, 0
      %p244 = por %p242, %p243
      %p245 = scmp.le.s32.totalorder 1, %s29
      %p246 = scmp.lt.s32.totalorder %s29, 3
      %p247 = pnand %p245, %p246
      %p248 = pneg %p247
      // Predicated region
      $region9: #{tpu_custom_call.1} parent=5 // pred_check
        _
      $region10: #{tpu_custom_call.1} parent=5 // pred_check_branch
        %250 = sbr.rel (%p247) target = $region12
      $region11: #{tpu_custom_call.1} parent=5 // pred_region
        %s251 = ssub.s32 %s29, 1
      $region12: #{tpu_custom_call.1} parent=5 // pred_fallthru
        _
      %p252 = scmp.lt.s32.totalorder %s29, 2
      // Predicated region
      $region13: #{tpu_custom_call.1} parent=5 // pred_check
        %p253 = pneg %p252
      $region14: #{tpu_custom_call.1} parent=5 // pred_check_branch
        %255 = sbr.rel (%p253) target = $region16
      $region15: #{tpu_custom_call.1} parent=5 // pred_region
        // Predicated region
        $region17: #{tpu_custom_call.1} parent=15 // pred_check
          %p256 = pneg %p49
        $region18: #{tpu_custom_call.1} parent=15 // pred_check_branch
          %258 = sbr.rel (%p256) target = $region20
        $region19: #{tpu_custom_call.1} parent=15 // pred_region
          %s259 = sand.u32 %s39, 1
          %s260 = scalar_lea.sflag [#allocation3], %s259
          %s261 = sand.u32 %s39, 1
          %s262 = smul.addr %s261, 512
          %s263 = scalar_lea.vmem [#allocation2], %s262
          %s264 = smul.u32 8, %s29
          %s266 = ssub.s32 8192, 8192
          %267 = vsyncadd %s260, %s266
          %s268 = smul.addr %s264, 16
          %s269 = smul.addr %s268, 64
          %s270 = scalar_lea.hbm %s0, %s269
          %s271 = sshll.u32 %s263, 4
          %s272 = int_to_ptr.vmem [resolvable:$true] %s271
          %277 = dma.hbm_to_vmem [thread:$0]  %s270, 8192, %s272, %s260, 64, 64, 4
        $region20: #{tpu_custom_call.1} parent=15 // pred_fallthru
          _
        // Predicated region
        $region21: #{tpu_custom_call.1} parent=15 // pred_check
          %p278 = pneg %p75
        $region22: #{tpu_custom_call.1} parent=15 // pred_check_branch
          %280 = sbr.rel (%p278) target = $region24
        $region23: #{tpu_custom_call.1} parent=15 // pred_region
          %s281 = sand.u32 %s29, 1
          %s282 = scalar_lea.sflag [#allocation6], %s281
          %s283 = sand.u32 %s65, 1
          %s284 = smul.addr %s283, 8
          %s285 = scalar_lea.vmem [#allocation5], %s284
          %s286 = smul.u32 8, %s29
          %s288 = ssub.s32 128, 128
          %289 = vsyncadd %s282, %s288
          %s290 = smul.addr %s286, 16
          %s291 = scalar_lea.hbm %s1, %s290
          %s292 = sshll.u32 %s285, 4
          %s293 = int_to_ptr.vmem [resolvable:$true] %s292
          %298 = dma.hbm_to_vmem [thread:$0]  %s291, 128, %s293, %s282, 16, 16, 1
        $region24: #{tpu_custom_call.1} parent=15 // pred_fallthru
          _
        // Predicated region
        $region25: #{tpu_custom_call.1} parent=15 // pred_check
          %p299 = pneg %p101
        $region26: #{tpu_custom_call.1} parent=15 // pred_check_branch
          %301 = sbr.rel (%p299) target = $region28
        $region27: #{tpu_custom_call.1} parent=15 // pred_region
          %s302 = sand.u32 %s29, 1
          %s303 = scalar_lea.sflag [#allocation6], %s302
          %s304 = sand.u32 %s91, 1
          %s305 = smul.addr %s304, 8
          %s306 = scalar_lea.vmem [#allocation7], %s305
          %s307 = smul.u32 8, %s29
          %s309 = ssub.s32 128, 128
          %310 = vsyncadd %s303, %s309
          %s311 = smul.addr %s307, 16
          %s312 = scalar_lea.hbm %s2, %s311
          %s313 = sshll.u32 %s306, 4
          %s314 = int_to_ptr.vmem [resolvable:$true] %s313
          %319 = dma.hbm_to_vmem [thread:$0]  %s312, 128, %s314, %s303, 16, 16, 1
        $region28: #{tpu_custom_call.1} parent=15 // pred_fallthru
          _
        // Predicated region
        $region29: #{tpu_custom_call.1} parent=15 // pred_check
          %p320 = pneg %p127
        $region30: #{tpu_custom_call.1} parent=15 // pred_check_branch
          %322 = sbr.rel (%p320) target = $region32
        $region31: #{tpu_custom_call.1} parent=15 // pred_region
          %s323 = sand.u32 %s29, 1
          %s324 = scalar_lea.sflag [#allocation9], %s323
          %s325 = sand.u32 %s117, 1
          %s326 = smul.addr %s325, 512
          %s327 = scalar_lea.vmem [#allocation8], %s326
          %s328 = smul.u32 8, %s29
          %s330 = ssub.s32 8192, 8192
          %331 = vsyncadd %s324, %s330
          %s332 = smul.addr %s328, 16
          %s333 = smul.addr %s332, 64
          %s334 = scalar_lea.hbm %s3, %s333
          %s335 = sshll.u32 %s327, 4
          %s336 = int_to_ptr.vmem [resolvable:$true] %s335
          %341 = dma.hbm_to_vmem [thread:$0]  %s334, 8192, %s336, %s324, 64, 64, 4
        $region32: #{tpu_custom_call.1} parent=15 // pred_fallthru
          _
        // Predicated region
        $region33: #{tpu_custom_call.1} parent=15 // pred_check
          %p342 = pneg %p153
        $region34: #{tpu_custom_call.1} parent=15 // pred_check_branch
          %344 = sbr.rel (%p342) target = $region36
        $region35: #{tpu_custom_call.1} parent=15 // pred_region
          %s345 = sand.u32 %s29, 1
          %s346 = scalar_lea.sflag [#allocation9], %s345
          %s347 = sand.u32 %s143, 1
          %s348 = smul.addr %s347, 8
          %s349 = scalar_lea.vmem [#allocation10], %s348
          %s350 = smul.u32 8, %s29
          %s352 = ssub.s32 128, 128
          %353 = vsyncadd %s346, %s352
          %s354 = smul.addr %s350, 16
          %s355 = scalar_lea.hbm %s4, %s354
          %s356 = sshll.u32 %s349, 4
          %s357 = int_to_ptr.vmem [resolvable:$true] %s356
          %362 = dma.hbm_to_vmem [thread:$0]  %s355, 128, %s357, %s346, 16, 16, 1
        $region36: #{tpu_custom_call.1} parent=15 // pred_fallthru
          _
        // Predicated region
        $region37: #{tpu_custom_call.1} parent=15 // pred_check
          %p363 = pneg %p179
        $region38: #{tpu_custom_call.1} parent=15 // pred_check_branch
          %365 = sbr.rel (%p363) target = $region40
        $region39: #{tpu_custom_call.1} parent=15 // pred_region
          %s366 = smul.u32 8, %s29
          %p367 = scmp.lt.s32.totalorder %s366, 15
          %s368 = scalar_select %p367, %s366, 15
          %s369 = scalar_lea.vmem %s5, %s368
          %s370 = smul.u32 8, %s29
        $region40: #{tpu_custom_call.1} parent=15 // pred_fallthru
          _
      $region16: #{tpu_custom_call.1} parent=5 // pred_fallthru
        _
      %p371 = scmp.le.s32.totalorder 1, %s29
      %p372 = scmp.lt.s32.totalorder %s29, 3
      %p373 = pnand %p371, %p372
      %p374 = pneg %p373
      // Predicated region
      $region41: #{tpu_custom_call.1} parent=5 // pred_check
        _
      $region42: #{tpu_custom_call.1} parent=5 // pred_check_branch
        %376 = sbr.rel (%p373) target = $region44
      $region43: #{tpu_custom_call.1} parent=5 // pred_region
        %s377 = ssub.s32 %s29, 1
        %s378 = sand.u32 %s42, 1
        %s379 = scalar_lea.sflag [#allocation3], %s378
        %s380 = sand.u32 %s42, 1
        %s381 = smul.addr %s380, 512
        %s382 = scalar_lea.vmem [#allocation2], %s381
        // Predicated region
        $region45: #{tpu_custom_call.1} parent=43 // pred_check
          %p383 = pneg %p55
        $region46: #{tpu_custom_call.1} parent=43 // pred_check_branch
          %385 = sbr.rel (%p383) target = $region48
        $region47: #{tpu_custom_call.1} parent=43 // pred_region
          %386 = dma.done %s379, 8192
        $region48: #{tpu_custom_call.1} parent=43 // pred_fallthru
          _
        %s387 = sand.u32 %s34, 1
        %s388 = scalar_lea.sflag [#allocation6], %s387
        %s389 = sand.u32 %s68, 1
        %s390 = smul.addr %s389, 8
        %s391 = scalar_lea.vmem [#allocation5], %s390
        // Predicated region
        $region49: #{tpu_custom_call.1} parent=43 // pred_check
          %p392 = pneg %p81
        $region50: #{tpu_custom_call.1} parent=43 // pred_check_branch
          %394 = sbr.rel (%p392) target = $region52
        $region51: #{tpu_custom_call.1} parent=43 // pred_region
          %395 = dma.done %s388, 128
        $region52: #{tpu_custom_call.1} parent=43 // pred_fallthru
          _
        %s396 = sand.u32 %s34, 1
        %s397 = scalar_lea.sflag [#allocation6], %s396
        %s398 = sand.u32 %s94, 1
        %s399 = smul.addr %s398, 8
        %s400 = scalar_lea.vmem [#allocation7], %s399
        // Predicated region
        $region53: #{tpu_custom_call.1} parent=43 // pred_check
          %p401 = pneg %p107
        $region54: #{tpu_custom_call.1} parent=43 // pred_check_branch
          %403 = sbr.rel (%p401) target = $region56
        $region55: #{tpu_custom_call.1} parent=43 // pred_region
          %404 = dma.done %s397, 128
        $region56: #{tpu_custom_call.1} parent=43 // pred_fallthru
          _
        %s405 = sand.u32 %s34, 1
        %s406 = scalar_lea.sflag [#allocation9], %s405
        %s407 = sand.u32 %s120, 1
        %s408 = smul.addr %s407, 512
        %s409 = scalar_lea.vmem [#allocation8], %s408
        // Predicated region
        $region57: #{tpu_custom_call.1} parent=43 // pred_check
          %p410 = pneg %p133
        $region58: #{tpu_custom_call.1} parent=43 // pred_check_branch
          %412 = sbr.rel (%p410) target = $region60
        $region59: #{tpu_custom_call.1} parent=43 // pred_region
          %413 = dma.done %s406, 8192
        $region60: #{tpu_custom_call.1} parent=43 // pred_fallthru
          _
        %s414 = sand.u32 %s34, 1
        %s415 = scalar_lea.sflag [#allocation9], %s414
        %s416 = sand.u32 %s146, 1
        %s417 = smul.addr %s416, 8
        %s418 = scalar_lea.vmem [#allocation10], %s417
        // Predicated region
        $region61: #{tpu_custom_call.1} parent=43 // pred_check
          %p419 = pneg %p159
        $region62: #{tpu_custom_call.1} parent=43 // pred_check_branch
          %421 = sbr.rel (%p419) target = $region64
        $region63: #{tpu_custom_call.1} parent=43 // pred_region
          %422 = dma.done %s415, 128
        $region64: #{tpu_custom_call.1} parent=43 // pred_fallthru
          _
        %s423 = sand.u32 %s42, 1
        %s424 = scalar_lea.sflag [#allocation3], %s423
        %s425 = sand.u32 %s42, 1
        %s426 = smul.addr %s425, 512
        %s427 = scalar_lea.vmem [#allocation2], %s426
        %p428 = pneg %p55
        %p429 = pneg %p52
        %s430 = sand.u32 %s34, 1
        %s431 = scalar_lea.sflag [#allocation6], %s430
        %s432 = sand.u32 %s68, 1
        %s433 = smul.addr %s432, 8
        %s434 = scalar_lea.vmem [#allocation5], %s433
        %p435 = pneg %p81
        %p436 = pneg %p78
        %s437 = sand.u32 %s34, 1
        %s438 = scalar_lea.sflag [#allocation6], %s437
        %s439 = sand.u32 %s94, 1
        %s440 = smul.addr %s439, 8
        %s441 = scalar_lea.vmem [#allocation7], %s440
        %p442 = pneg %p107
        %p443 = pneg %p104
        %s444 = sand.u32 %s34, 1
        %s445 = scalar_lea.sflag [#allocation9], %s444
        %s446 = sand.u32 %s120, 1
        %s447 = smul.addr %s446, 512
        %s448 = scalar_lea.vmem [#allocation8], %s447
        %p449 = pneg %p133
        %p450 = pneg %p130
        %s451 = sand.u32 %s34, 1
        %s452 = scalar_lea.sflag [#allocation9], %s451
        %s453 = sand.u32 %s146, 1
        %s454 = smul.addr %s453, 8
        %s455 = scalar_lea.vmem [#allocation10], %s454
        %p456 = pneg %p159
        %p457 = pneg %p156
        %s458 = smul.u32 8, %s34
        %p459 = scmp.lt.s32.totalorder %s458, 15
        %s460 = scalar_select %p459, %s458, 15
        %s461 = scalar_lea.vmem %s5, %s460
        %p462 = pneg %p185
        %p463 = pneg %p182
        %p464 = pneg %p211
        %p465 = pneg %p208
        %s466 = sand.u32 %s198, 1
        %s467 = scalar_lea.sflag [#allocation4], %s466
        %s468 = sand.u32 %s198, 1
        %s469 = smul.addr %s468, 64
        %s470 = scalar_lea.vmem [#allocation11], %s469
        %p471 = pneg %p237
        %p472 = pneg %p234
        %s473 = sand.u32 %s224, 1
        %s474 = scalar_lea.sflag [#allocation13], %s473
        %s475 = sand.u32 %s224, 1
        %s476 = scalar_lea.vmem [#allocation12], %s475
        %s477 = smul.u32 8, %s34
        %s478 = smul.u32 8, %s34
        %s479 = smul.u32 8, %s34
        %s480 = smul.u32 8, %s34
        %s481 = smul.u32 8, %s34
        %s482 = smul.u32 8, %s34
        %p483 = scmp.lt.s32.totalorder %s482, 15
        %s484 = scalar_select %p483, %s482, 15
        %s485 = scalar_lea.vmem %s5, %s484
        %s486 = smul.u32 8, %s34
        %s487 = smul.u32 8, %s34
        %v489 = vlaneseq
        %v490 = vshrl.u32 %v489, 7
        %v491 = vadd.s32 %v490, 1
        %v492 = vld [vmem:[%s485] sm:$0x1]
        %v493 = vld [vmem:[%s485 + $0x1] sm:$0x1]
        %v494 = vld [vmem:[%s485 + $0x2] sm:$0x1]
        %v495 = vld [vmem:[%s485 + $0x3] sm:$0x1]
        %v496 = vld [vmem:[%s485 + $0x4] sm:$0x1]
        %v497 = vld [vmem:[%s485 + $0x5] sm:$0x1]
        %v498 = vld [vmem:[%s485 + $0x6] sm:$0x1]
        %v499 = vld [vmem:[%s485 + $0x7] sm:$0x1]
        %v500 = vlaneseq
        %v501 = vshrl.u32 %v500, 7
        %v502 = vsub.s32 0, %v501
        %v503 = vrot.slane %v492, %v502
        %v504 = vlaneseq
        %v505 = vshrl.u32 %v504, 7
        %v506 = vsub.s32 0, %v505
        %v507 = vrot.slane %v493, %v506
        %v508 = vlaneseq
        %v509 = vshrl.u32 %v508, 7
        %v510 = vsub.s32 0, %v509
        %v511 = vrot.slane %v494, %v510
        %v512 = vlaneseq
        %v513 = vshrl.u32 %v512, 7
        %v514 = vsub.s32 0, %v513
        %v515 = vrot.slane %v495, %v514
        %v516 = vlaneseq
        %v517 = vshrl.u32 %v516, 7
        %v518 = vsub.s32 0, %v517
        %v519 = vrot.slane %v496, %v518
        %v520 = vlaneseq
        %v521 = vshrl.u32 %v520, 7
        %v522 = vsub.s32 0, %v521
        %v523 = vrot.slane %v497, %v522
        %v524 = vlaneseq
        %v525 = vshrl.u32 %v524, 7
        %v526 = vsub.s32 0, %v525
        %v527 = vrot.slane %v498, %v526
        %v528 = vlaneseq
        %v529 = vshrl.u32 %v528, 7
        %v530 = vsub.s32 0, %v529
        %v531 = vrot.slane %v499, %v530
        %vm532 = vcmp.eq.s32.totalorder %v491, %v503
        %vm533 = vcmp.eq.s32.totalorder %v491, %v507
        %vm534 = vcmp.eq.s32.totalorder %v491, %v511
        %vm535 = vcmp.eq.s32.totalorder %v491, %v515
        %vm536 = vcmp.eq.s32.totalorder %v491, %v519
        %vm537 = vcmp.eq.s32.totalorder %v491, %v523
        %vm538 = vcmp.eq.s32.totalorder %v491, %v527
        %vm539 = vcmp.eq.s32.totalorder %v491, %v531
        %v540 = vld [vmem:[%s418] sm:$0x1]
        %v541 = vld [vmem:[%s418 + $0x1] sm:$0x1]
        %v542 = vld [vmem:[%s418 + $0x2] sm:$0x1]
        %v543 = vld [vmem:[%s418 + $0x3] sm:$0x1]
        %v544 = vld [vmem:[%s418 + $0x4] sm:$0x1]
        %v545 = vld [vmem:[%s418 + $0x5] sm:$0x1]
        %v546 = vld [vmem:[%s418 + $0x6] sm:$0x1]
        %v547 = vld [vmem:[%s418 + $0x7] sm:$0x1]
        %v556 = vlaneseq
        %v557 = vshrl.u32 %v556, 7
        %v558 = vsub.s32 0, %v557
        %v559 = vrot.slane %v540, %v558
        %v560 = vlaneseq
        %v561 = vshrl.u32 %v560, 7
        %v562 = vsub.s32 0, %v561
        %v563 = vrot.slane %v541, %v562
        %v564 = vlaneseq
        %v565 = vshrl.u32 %v564, 7
        %v566 = vsub.s32 0, %v565
        %v567 = vrot.slane %v542, %v566
        %v568 = vlaneseq
        %v569 = vshrl.u32 %v568, 7
        %v570 = vsub.s32 0, %v569
        %v571 = vrot.slane %v543, %v570
        %v572 = vlaneseq
        %v573 = vshrl.u32 %v572, 7
        %v574 = vsub.s32 0, %v573
        %v575 = vrot.slane %v544, %v574
        %v576 = vlaneseq
        %v577 = vshrl.u32 %v576, 7
        %v578 = vsub.s32 0, %v577
        %v579 = vrot.slane %v545, %v578
        %v580 = vlaneseq
        %v581 = vshrl.u32 %v580, 7
        %v582 = vsub.s32 0, %v581
        %v583 = vrot.slane %v546, %v582
        %v584 = vlaneseq
        %v585 = vshrl.u32 %v584, 7
        %v586 = vsub.s32 0, %v585
        %v587 = vrot.slane %v547, %v586
        %v596 = vsel %vm532, %v559, 0.0
        %v597 = vsel %vm533, %v563, 0.0
        %v598 = vsel %vm534, %v567, 0.0
        %v599 = vsel %vm535, %v571, 0.0
        %v600 = vsel %vm536, %v575, 0.0
        %v601 = vsel %vm537, %v579, 0.0
        %v602 = vsel %vm538, %v583, 0.0
        %v603 = vsel %vm539, %v587, 0.0
        %604 = vadd.xlane.f32.xlu0 %v596
        %v605 = vpop.xlane.xlu0 %604
        %606 = vadd.xlane.f32.xlu0 %v597
        %v607 = vpop.xlane.xlu0 %606
        %608 = vadd.xlane.f32.xlu0 %v598
        %v609 = vpop.xlane.xlu0 %608
        %610 = vadd.xlane.f32.xlu0 %v599
        %v611 = vpop.xlane.xlu0 %610
        %612 = vadd.xlane.f32.xlu0 %v600
        %v613 = vpop.xlane.xlu0 %612
        %614 = vadd.xlane.f32.xlu0 %v601
        %v615 = vpop.xlane.xlu0 %614
        %616 = vadd.xlane.f32.xlu0 %v602
        %v617 = vpop.xlane.xlu0 %616
        %618 = vadd.xlane.f32.xlu0 %v603
        %v619 = vpop.xlane.xlu0 %618
        %v620 = vpack.c.bf16 %v596, %v596
        %v621 = vpack.c.bf16 %v597, %v597
        %v622 = vpack.c.bf16 %v598, %v598
        %v623 = vpack.c.bf16 %v599, %v599
        %v624 = vpack.c.bf16 %v600, %v600
        %v625 = vpack.c.bf16 %v601, %v601
        %v626 = vpack.c.bf16 %v602, %v602
        %v627 = vpack.c.bf16 %v603, %v603
        %v628 = vld [vmem:[%s409] sm:$0xf]
        %v629 = vld [vmem:[%s409 + $0x4] sm:$0xf]
        %v630 = vld [vmem:[%s409 + $0x8] sm:$0xf]
        %v631 = vld [vmem:[%s409 + $0xc] sm:$0xf]
        %v632 = vld [vmem:[%s409 + $0x10] sm:$0xf]
        %v633 = vld [vmem:[%s409 + $0x14] sm:$0xf]
        %v634 = vld [vmem:[%s409 + $0x18] sm:$0xf]
        %v635 = vld [vmem:[%s409 + $0x1c] sm:$0xf]
        %v636 = vld [vmem:[%s409 + $0x20] sm:$0xf]
        %v637 = vld [vmem:[%s409 + $0x24] sm:$0xf]
        %v638 = vld [vmem:[%s409 + $0x28] sm:$0xf]
        %v639 = vld [vmem:[%s409 + $0x2c] sm:$0xf]
        %v640 = vld [vmem:[%s409 + $0x30] sm:$0xf]
        %v641 = vld [vmem:[%s409 + $0x34] sm:$0xf]
        %v642 = vld [vmem:[%s409 + $0x38] sm:$0xf]
        %v643 = vld [vmem:[%s409 + $0x3c] sm:$0xf]
        %v644 = vld [vmem:[%s409 + $0x40] sm:$0xf]
        %v645 = vld [vmem:[%s409 + $0x44] sm:$0xf]
        %v646 = vld [vmem:[%s409 + $0x48] sm:$0xf]
        %v647 = vld [vmem:[%s409 + $0x4c] sm:$0xf]
        %v648 = vld [vmem:[%s409 + $0x50] sm:$0xf]
        %v649 = vld [vmem:[%s409 + $0x54] sm:$0xf]
        %v650 = vld [vmem:[%s409 + $0x58] sm:$0xf]
        %v651 = vld [vmem:[%s409 + $0x5c] sm:$0xf]
        %v652 = vld [vmem:[%s409 + $0x60] sm:$0xf]
        %v653 = vld [vmem:[%s409 + $0x64] sm:$0xf]
        %v654 = vld [vmem:[%s409 + $0x68] sm:$0xf]
        %v655 = vld [vmem:[%s409 + $0x6c] sm:$0xf]
        %v656 = vld [vmem:[%s409 + $0x70] sm:$0xf]
        %v657 = vld [vmem:[%s409 + $0x74] sm:$0xf]
        %v658 = vld [vmem:[%s409 + $0x78] sm:$0xf]
        %v659 = vld [vmem:[%s409 + $0x7c] sm:$0xf]
        %v660 = vld [vmem:[%s409 + $0x80] sm:$0xf]
        %v661 = vld [vmem:[%s409 + $0x84] sm:$0xf]
        %v662 = vld [vmem:[%s409 + $0x88] sm:$0xf]
        %v663 = vld [vmem:[%s409 + $0x8c] sm:$0xf]
        %v664 = vld [vmem:[%s409 + $0x90] sm:$0xf]
        %v665 = vld [vmem:[%s409 + $0x94] sm:$0xf]
        %v666 = vld [vmem:[%s409 + $0x98] sm:$0xf]
        %v667 = vld [vmem:[%s409 + $0x9c] sm:$0xf]
        %v668 = vld [vmem:[%s409 + $0xa0] sm:$0xf]
        %v669 = vld [vmem:[%s409 + $0xa4] sm:$0xf]
        %v670 = vld [vmem:[%s409 + $0xa8] sm:$0xf]
        %v671 = vld [vmem:[%s409 + $0xac] sm:$0xf]
        %v672 = vld [vmem:[%s409 + $0xb0] sm:$0xf]
        %v673 = vld [vmem:[%s409 + $0xb4] sm:$0xf]
        %v674 = vld [vmem:[%s409 + $0xb8] sm:$0xf]
        %v675 = vld [vmem:[%s409 + $0xbc] sm:$0xf]
        %v676 = vld [vmem:[%s409 + $0xc0] sm:$0xf]
        %v677 = vld [vmem:[%s409 + $0xc4] sm:$0xf]
        %v678 = vld [vmem:[%s409 + $0xc8] sm:$0xf]
        %v679 = vld [vmem:[%s409 + $0xcc] sm:$0xf]
        %v680 = vld [vmem:[%s409 + $0xd0] sm:$0xf]
        %v681 = vld [vmem:[%s409 + $0xd4] sm:$0xf]
        %v682 = vld [vmem:[%s409 + $0xd8] sm:$0xf]
        %v683 = vld [vmem:[%s409 + $0xdc] sm:$0xf]
        %v684 = vld [vmem:[%s409 + $0xe0] sm:$0xf]
        %v685 = vld [vmem:[%s409 + $0xe4] sm:$0xf]
        %v686 = vld [vmem:[%s409 + $0xe8] sm:$0xf]
        %v687 = vld [vmem:[%s409 + $0xec] sm:$0xf]
        %v688 = vld [vmem:[%s409 + $0xf0] sm:$0xf]
        %v689 = vld [vmem:[%s409 + $0xf4] sm:$0xf]
        %v690 = vld [vmem:[%s409 + $0xf8] sm:$0xf]
        %v691 = vld [vmem:[%s409 + $0xfc] sm:$0xf]
        %v692 = vld [vmem:[%s409 + $0x100] sm:$0xf]
        %v693 = vld [vmem:[%s409 + $0x104] sm:$0xf]
        %v694 = vld [vmem:[%s409 + $0x108] sm:$0xf]
        %v695 = vld [vmem:[%s409 + $0x10c] sm:$0xf]
        %v696 = vld [vmem:[%s409 + $0x110] sm:$0xf]
        %v697 = vld [vmem:[%s409 + $0x114] sm:$0xf]
        %v698 = vld [vmem:[%s409 + $0x118] sm:$0xf]
        %v699 = vld [vmem:[%s409 + $0x11c] sm:$0xf]
        %v700 = vld [vmem:[%s409 + $0x120] sm:$0xf]
        %v701 = vld [vmem:[%s409 + $0x124] sm:$0xf]
        %v702 = vld [vmem:[%s409 + $0x128] sm:$0xf]
        %v703 = vld [vmem:[%s409 + $0x12c] sm:$0xf]
        %v704 = vld [vmem:[%s409 + $0x130] sm:$0xf]
        %v705 = vld [vmem:[%s409 + $0x134] sm:$0xf]
        %v706 = vld [vmem:[%s409 + $0x138] sm:$0xf]
        %v707 = vld [vmem:[%s409 + $0x13c] sm:$0xf]
        %v708 = vld [vmem:[%s409 + $0x140] sm:$0xf]
        %v709 = vld [vmem:[%s409 + $0x144] sm:$0xf]
        %v710 = vld [vmem:[%s409 + $0x148] sm:$0xf]
        %v711 = vld [vmem:[%s409 + $0x14c] sm:$0xf]
        %v712 = vld [vmem:[%s409 + $0x150] sm:$0xf]
        %v713 = vld [vmem:[%s409 + $0x154] sm:$0xf]
        %v714 = vld [vmem:[%s409 + $0x158] sm:$0xf]
        %v715 = vld [vmem:[%s409 + $0x15c] sm:$0xf]
        %v716 = vld [vmem:[%s409 + $0x160] sm:$0xf]
        %v717 = vld [vmem:[%s409 + $0x164] sm:$0xf]
        %v718 = vld [vmem:[%s409 + $0x168] sm:$0xf]
        %v719 = vld [vmem:[%s409 + $0x16c] sm:$0xf]
        %v720 = vld [vmem:[%s409 + $0x170] sm:$0xf]
        %v721 = vld [vmem:[%s409 + $0x174] sm:$0xf]
        %v722 = vld [vmem:[%s409 + $0x178] sm:$0xf]
        %v723 = vld [vmem:[%s409 + $0x17c] sm:$0xf]
        %v724 = vld [vmem:[%s409 + $0x180] sm:$0xf]
        %v725 = vld [vmem:[%s409 + $0x184] sm:$0xf]
        %v726 = vld [vmem:[%s409 + $0x188] sm:$0xf]
        %v727 = vld [vmem:[%s409 + $0x18c] sm:$0xf]
        %v728 = vld [vmem:[%s409 + $0x190] sm:$0xf]
        %v729 = vld [vmem:[%s409 + $0x194] sm:$0xf]
        %v730 = vld [vmem:[%s409 + $0x198] sm:$0xf]
        %v731 = vld [vmem:[%s409 + $0x19c] sm:$0xf]
        %v732 = vld [vmem:[%s409 + $0x1a0] sm:$0xf]
        %v733 = vld [vmem:[%s409 + $0x1a4] sm:$0xf]
        %v734 = vld [vmem:[%s409 + $0x1a8] sm:$0xf]
        %v735 = vld [vmem:[%s409 + $0x1ac] sm:$0xf]
        %v736 = vld [vmem:[%s409 + $0x1b0] sm:$0xf]
        %v737 = vld [vmem:[%s409 + $0x1b4] sm:$0xf]
        %v738 = vld [vmem:[%s409 + $0x1b8] sm:$0xf]
        %v739 = vld [vmem:[%s409 + $0x1bc] sm:$0xf]
        %v740 = vld [vmem:[%s409 + $0x1c0] sm:$0xf]
        %v741 = vld [vmem:[%s409 + $0x1c4] sm:$0xf]
        %v742 = vld [vmem:[%s409 + $0x1c8] sm:$0xf]
        %v743 = vld [vmem:[%s409 + $0x1cc] sm:$0xf]
        %v744 = vld [vmem:[%s409 + $0x1d0] sm:$0xf]
        %v745 = vld [vmem:[%s409 + $0x1d4] sm:$0xf]
        %v746 = vld [vmem:[%s409 + $0x1d8] sm:$0xf]
        %v747 = vld [vmem:[%s409 + $0x1dc] sm:$0xf]
        %v748 = vld [vmem:[%s409 + $0x1e0] sm:$0xf]
        %v749 = vld [vmem:[%s409 + $0x1e4] sm:$0xf]
        %v750 = vld [vmem:[%s409 + $0x1e8] sm:$0xf]
        %v751 = vld [vmem:[%s409 + $0x1ec] sm:$0xf]
        %v752 = vld [vmem:[%s409 + $0x1f0] sm:$0xf]
        %v753 = vld [vmem:[%s409 + $0x1f4] sm:$0xf]
        %v754 = vld [vmem:[%s409 + $0x1f8] sm:$0xf]
        %v755 = vld [vmem:[%s409 + $0x1fc] sm:$0xf]
        %v772 = vunpack.c.l.b16 %v628
        %v773 = vunpack.c.l.b16 %v629
        %v774 = vunpack.c.l.b16 %v630
        %v775 = vunpack.c.l.b16 %v631
        %v776 = vunpack.c.l.b16 %v632
        %v777 = vunpack.c.l.b16 %v633
        %v778 = vunpack.c.l.b16 %v634
        %v779 = vunpack.c.l.b16 %v635
        %v780 = vunpack.c.l.b16 %v636
        %v781 = vunpack.c.l.b16 %v637
        %v782 = vunpack.c.l.b16 %v638
        %v783 = vunpack.c.l.b16 %v639
        %v784 = vunpack.c.l.b16 %v640
        %v785 = vunpack.c.l.b16 %v641
        %v786 = vunpack.c.l.b16 %v642
        %v787 = vunpack.c.l.b16 %v643
        %v788 = vpack.c.b16 %v773, %v772
        %v789 = vpack.c.b16 %v775, %v774
        %v790 = vpack.c.b16 %v777, %v776
        %v791 = vpack.c.b16 %v779, %v778
        %v792 = vpack.c.b16 %v781, %v780
        %v793 = vpack.c.b16 %v783, %v782
        %v794 = vpack.c.b16 %v785, %v784
        %v795 = vpack.c.b16 %v787, %v786
        %804 = vmatprep.subr.bf16.mxu0 0
        %805 = vmatpush1.bf16.msra.mxu0 %v788
        %806 = vmatprep.subr.bf16.mxu0 0
        %807 = vmatpush1.bf16.msra.mxu0 %v789
        %808 = vmatprep.subr.bf16.mxu0 0
        %809 = vmatpush1.bf16.msra.mxu0 %v790
        %810 = vmatprep.subr.bf16.mxu0 0
        %811 = vmatpush1.bf16.msra.mxu0 %v791
        %812 = vmatprep.subr.bf16.mxu0 0
        %813 = vmatpush1.bf16.msra.mxu0 %v792
        %814 = vmatprep.subr.bf16.mxu0 0
        %815 = vmatpush1.bf16.msra.mxu0 %v793
        %816 = vmatprep.subr.bf16.mxu0 0
        %817 = vmatpush1.bf16.msra.mxu0 %v794
        %818 = vmatprep.subr.bf16.mxu0 0
        %819 = vmatpush1.bf16.msra.mxu0 %v795
        %820 = vmatprep.subr.bf16.mxu0 0
        %821 = vmatpush1.bf16.msra.mxu0 0
        %822 = vmatprep.subr.bf16.mxu0 0
        %823 = vmatpush1.bf16.msra.mxu0 0
        %824 = vmatprep.subr.bf16.mxu0 0
        %825 = vmatpush1.bf16.msra.mxu0 0
        %826 = vmatprep.subr.bf16.mxu0 0
        %827 = vmatpush1.bf16.msra.mxu0 0
        %828 = vmatprep.subr.bf16.mxu0 0
        %829 = vmatpush1.bf16.msra.mxu0 0
        %830 = vmatprep.subr.bf16.mxu0 0
        %831 = vmatpush1.bf16.msra.mxu0 0
        %832 = vmatprep.subr.bf16.mxu0 0
        %833 = vmatpush1.bf16.msra.mxu0 0
        %834 = vmatprep.subr.bf16.mxu0 0
        %835 = vmatpush1.bf16.msra.mxu0 0
        %836 = vmatprep.mubr.bf16.mxu0 0
        %837 = vmatmul.mubr.bf16.gmra.mrb[0].mxu0 %v620
        %v838 = vpop.f32.mrb[0].mxu0
        %v839 = vadd.f32 0.0, %v838
        %v840 = vpop.f32.mrb[0].mxu0
        %v841 = vpop.f32.mrb[0].mxu0
        %v842 = vpop.f32.mrb[0].mxu0
        %843 = vdwg.mxu0
        %v860 = vunpack.c.l.b16 %v644
        %v861 = vunpack.c.l.b16 %v645
        %v862 = vunpack.c.l.b16 %v646
        %v863 = vunpack.c.l.b16 %v647
        %v864 = vunpack.c.l.b16 %v648
        %v865 = vunpack.c.l.b16 %v649
        %v866 = vunpack.c.l.b16 %v650
        %v867 = vunpack.c.l.b16 %v651
        %v868 = vunpack.c.l.b16 %v652
        %v869 = vunpack.c.l.b16 %v653
        %v870 = vunpack.c.l.b16 %v654
        %v871 = vunpack.c.l.b16 %v655
        %v872 = vunpack.c.l.b16 %v656
        %v873 = vunpack.c.l.b16 %v657
        %v874 = vunpack.c.l.b16 %v658
        %v875 = vunpack.c.l.b16 %v659
        %v876 = vpack.c.b16 %v861, %v860
        %v877 = vpack.c.b16 %v863, %v862
        %v878 = vpack.c.b16 %v865, %v864
        %v879 = vpack.c.b16 %v867, %v866
        %v880 = vpack.c.b16 %v869, %v868
        %v881 = vpack.c.b16 %v871, %v870
        %v882 = vpack.c.b16 %v873, %v872
        %v883 = vpack.c.b16 %v875, %v874
        %892 = vmatprep.subr.bf16.mxu0 0
        %893 = vmatpush1.bf16.msra.mxu0 %v876
        %894 = vmatprep.subr.bf16.mxu0 0
        %895 = vmatpush1.bf16.msra.mxu0 %v877
        %896 = vmatprep.subr.bf16.mxu0 0
        %897 = vmatpush1.bf16.msra.mxu0 %v878
        %898 = vmatprep.subr.bf16.mxu0 0
        %899 = vmatpush1.bf16.msra.mxu0 %v879
        %900 = vmatprep.subr.bf16.mxu0 0
        %901 = vmatpush1.bf16.msra.mxu0 %v880
        %902 = vmatprep.subr.bf16.mxu0 0
        %903 = vmatpush1.bf16.msra.mxu0 %v881
        %904 = vmatprep.subr.bf16.mxu0 0
        %905 = vmatpush1.bf16.msra.mxu0 %v882
        %906 = vmatprep.subr.bf16.mxu0 0
        %907 = vmatpush1.bf16.msra.mxu0 %v883
        %908 = vmatprep.subr.bf16.mxu0 0
        %909 = vmatpush1.bf16.msra.mxu0 0
        %910 = vmatprep.subr.bf16.mxu0 0
        %911 = vmatpush1.bf16.msra.mxu0 0
        %912 = vmatprep.subr.bf16.mxu0 0
        %913 = vmatpush1.bf16.msra.mxu0 0
        %914 = vmatprep.subr.bf16.mxu0 0
        %915 = vmatpush1.bf16.msra.mxu0 0
        %916 = vmatprep.subr.bf16.mxu0 0
        %917 = vmatpush1.bf16.msra.mxu0 0
        %918 = vmatprep.subr.bf16.mxu0 0
        %919 = vmatpush1.bf16.msra.mxu0 0
        %920 = vmatprep.subr.bf16.mxu0 0
        %921 = vmatpush1.bf16.msra.mxu0 0
        %922 = vmatprep.subr.bf16.mxu0 0
        %923 = vmatpush1.bf16.msra.mxu0 0
        %924 = vmatprep.mubr.bf16.mxu0 0
        %925 = vmatmul.mubr.bf16.gmra.mrb[0].mxu0 %v621
        %v926 = vpop.f32.mrb[0].mxu0
        %v927 = vadd.f32 0.0, %v926
        %v928 = vpop.f32.mrb[0].mxu0
        %v929 = vpop.f32.mrb[0].mxu0
        %v930 = vpop.f32.mrb[0].mxu0
        %931 = vdwg.mxu0
        %v948 = vunpack.c.l.b16 %v660
        %v949 = vunpack.c.l.b16 %v661
        %v950 = vunpack.c.l.b16 %v662
        %v951 = vunpack.c.l.b16 %v663
        %v952 = vunpack.c.l.b16 %v664
        %v953 = vunpack.c.l.b16 %v665
        %v954 = vunpack.c.l.b16 %v666
        %v955 = vunpack.c.l.b16 %v667
        %v956 = vunpack.c.l.b16 %v668
        %v957 = vunpack.c.l.b16 %v669
        %v958 = vunpack.c.l.b16 %v670
        %v959 = vunpack.c.l.b16 %v671
        %v960 = vunpack.c.l.b16 %v672
        %v961 = vunpack.c.l.b16 %v673
        %v962 = vunpack.c.l.b16 %v674
        %v963 = vunpack.c.l.b16 %v675
        %v964 = vpack.c.b16 %v949, %v948
        %v965 = vpack.c.b16 %v951, %v950
        %v966 = vpack.c.b16 %v953, %v952
        %v967 = vpack.c.b16 %v955, %v954
        %v968 = vpack.c.b16 %v957, %v956
        %v969 = vpack.c.b16 %v959, %v958
        %v970 = vpack.c.b16 %v961, %v960
        %v971 = vpack.c.b16 %v963, %v962
        %980 = vmatprep.subr.bf16.mxu0 0
        %981 = vmatpush1.bf16.msra.mxu0 %v964
        %982 = vmatprep.subr.bf16.mxu0 0
        %983 = vmatpush1.bf16.msra.mxu0 %v965
        %984 = vmatprep.subr.bf16.mxu0 0
        %985 = vmatpush1.bf16.msra.mxu0 %v966
        %986 = vmatprep.subr.bf16.mxu0 0
        %987 = vmatpush1.bf16.msra.mxu0 %v967
        %988 = vmatprep.subr.bf16.mxu0 0
        %989 = vmatpush1.bf16.msra.mxu0 %v968
        %990 = vmatprep.subr.bf16.mxu0 0
        %991 = vmatpush1.bf16.msra.mxu0 %v969
        %992 = vmatprep.subr.bf16.mxu0 0
        %993 = vmatpush1.bf16.msra.mxu0 %v970
        %994 = vmatprep.subr.bf16.mxu0 0
        %995 = vmatpush1.bf16.msra.mxu0 %v971
        %996 = vmatprep.subr.bf16.mxu0 0
        %997 = vmatpush1.bf16.msra.mxu0 0
        %998 = vmatprep.subr.bf16.mxu0 0
        %999 = vmatpush1.bf16.msra.mxu0 0
        %1000 = vmatprep.subr.bf16.mxu0 0
        %1001 = vmatpush1.bf16.msra.mxu0 0
        %1002 = vmatprep.subr.bf16.mxu0 0
        %1003 = vmatpush1.bf16.msra.mxu0 0
        %1004 = vmatprep.subr.bf16.mxu0 0
        %1005 = vmatpush1.bf16.msra.mxu0 0
        %1006 = vmatprep.subr.bf16.mxu0 0
        %1007 = vmatpush1.bf16.msra.mxu0 0
        %1008 = vmatprep.subr.bf16.mxu0 0
        %1009 = vmatpush1.bf16.msra.mxu0 0
        %1010 = vmatprep.subr.bf16.mxu0 0
        %1011 = vmatpush1.bf16.msra.mxu0 0
        %1012 = vmatprep.mubr.bf16.mxu0 0
        %1013 = vmatmul.mubr.bf16.gmra.mrb[0].mxu0 %v622
        %v1014 = vpop.f32.mrb[0].mxu0
        %v1015 = vadd.f32 0.0, %v1014
        %v1016 = vpop.f32.mrb[0].mxu0
        %v1017 = vpop.f32.mrb[0].mxu0
        %v1018 = vpop.f32.mrb[0].mxu0
        %1019 = vdwg.mxu0
        %v1036 = vunpack.c.l.b16 %v676
        %v1037 = vunpack.c.l.b16 %v677
        %v1038 = vunpack.c.l.b16 %v678
        %v1039 = vunpack.c.l.b16 %v679
        %v1040 = vunpack.c.l.b16 %v680
        %v1041 = vunpack.c.l.b16 %v681
        %v1042 = vunpack.c.l.b16 %v682
        %v1043 = vunpack.c.l.b16 %v683
        %v1044 = vunpack.c.l.b16 %v684
        %v1045 = vunpack.c.l.b16 %v685
        %v1046 = vunpack.c.l.b16 %v686
        %v1047 = vunpack.c.l.b16 %v687
        %v1048 = vunpack.c.l.b16 %v688
        %v1049 = vunpack.c.l.b16 %v689
        %v1050 = vunpack.c.l.b16 %v690
        %v1051 = vunpack.c.l.b16 %v691
        %v1052 = vpack.c.b16 %v1037, %v1036
        %v1053 = vpack.c.b16 %v1039, %v1038
        %v1054 = vpack.c.b16 %v1041, %v1040
        %v1055 = vpack.c.b16 %v1043, %v1042
        %v1056 = vpack.c.b16 %v1045, %v1044
        %v1057 = vpack.c.b16 %v1047, %v1046
        %v1058 = vpack.c.b16 %v1049, %v1048
        %v1059 = vpack.c.b16 %v1051, %v1050
        %1068 = vmatprep.subr.bf16.mxu0 0
        %1069 = vmatpush1.bf16.msra.mxu0 %v1052
        %1070 = vmatprep.subr.bf16.mxu0 0
        %1071 = vmatpush1.bf16.msra.mxu0 %v1053
        %1072 = vmatprep.subr.bf16.mxu0 0
        %1073 = vmatpush1.bf16.msra.mxu0 %v1054
        %1074 = vmatprep.subr.bf16.mxu0 0
        %1075 = vmatpush1.bf16.msra.mxu0 %v1055
        %1076 = vmatprep.subr.bf16.mxu0 0
        %1077 = vmatpush1.bf16.msra.mxu0 %v1056
        %1078 = vmatprep.subr.bf16.mxu0 0
        %1079 = vmatpush1.bf16.msra.mxu0 %v1057
        %1080 = vmatprep.subr.bf16.mxu0 0
        %1081 = vmatpush1.bf16.msra.mxu0 %v1058
        %1082 = vmatprep.subr.bf16.mxu0 0
        %1083 = vmatpush1.bf16.msra.mxu0 %v1059
        %1084 = vmatprep.subr.bf16.mxu0 0
        %1085 = vmatpush1.bf16.msra.mxu0 0
        %1086 = vmatprep.subr.bf16.mxu0 0
        %1087 = vmatpush1.bf16.msra.mxu0 0
        %1088 = vmatprep.subr.bf16.mxu0 0
        %1089 = vmatpush1.bf16.msra.mxu0 0
        %1090 = vmatprep.subr.bf16.mxu0 0
        %1091 = vmatpush1.bf16.msra.mxu0 0
        %1092 = vmatprep.subr.bf16.mxu0 0
        %1093 = vmatpush1.bf16.msra.mxu0 0
        %1094 = vmatprep.subr.bf16.mxu0 0
        %1095 = vmatpush1.bf16.msra.mxu0 0
        %1096 = vmatprep.subr.bf16.mxu0 0
        %1097 = vmatpush1.bf16.msra.mxu0 0
        %1098 = vmatprep.subr.bf16.mxu0 0
        %1099 = vmatpush1.bf16.msra.mxu0 0
        %1100 = vmatprep.mubr.bf16.mxu0 0
        %1101 = vmatmul.mubr.bf16.gmra.mrb[0].mxu0 %v623
        %v1102 = vpop.f32.mrb[0].mxu0
        %v1103 = vadd.f32 0.0, %v1102
        %v1104 = vpop.f32.mrb[0].mxu0
        %v1105 = vpop.f32.mrb[0].mxu0
        %v1106 = vpop.f32.mrb[0].mxu0
        %1107 = vdwg.mxu0
        %v1124 = vunpack.c.l.b16 %v692
        %v1125 = vunpack.c.l.b16 %v693
        %v1126 = vunpack.c.l.b16 %v694
        %v1127 = vunpack.c.l.b16 %v695
        %v1128 = vunpack.c.l.b16 %v696
        %v1129 = vunpack.c.l.b16 %v697
        %v1130 = vunpack.c.l.b16 %v698
        %v1131 = vunpack.c.l.b16 %v699
        %v1132 = vunpack.c.l.b16 %v700
        %v1133 = vunpack.c.l.b16 %v701
        %v1134 = vunpack.c.l.b16 %v702
        %v1135 = vunpack.c.l.b16 %v703
        %v1136 = vunpack.c.l.b16 %v704
        %v1137 = vunpack.c.l.b16 %v705
        %v1138 = vunpack.c.l.b16 %v706
        %v1139 = vunpack.c.l.b16 %v707
        %v1140 = vpack.c.b16 %v1125, %v1124
        %v1141 = vpack.c.b16 %v1127, %v1126
        %v1142 = vpack.c.b16 %v1129, %v1128
        %v1143 = vpack.c.b16 %v1131, %v1130
        %v1144 = vpack.c.b16 %v1133, %v1132
        %v1145 = vpack.c.b16 %v1135, %v1134
        %v1146 = vpack.c.b16 %v1137, %v1136
        %v1147 = vpack.c.b16 %v1139, %v1138
        %1156 = vmatprep.subr.bf16.mxu0 0
        %1157 = vmatpush1.bf16.msra.mxu0 %v1140
        %1158 = vmatprep.subr.bf16.mxu0 0
        %1159 = vmatpush1.bf16.msra.mxu0 %v1141
        %1160 = vmatprep.subr.bf16.mxu0 0
        %1161 = vmatpush1.bf16.msra.mxu0 %v1142
        %1162 = vmatprep.subr.bf16.mxu0 0
        %1163 = vmatpush1.bf16.msra.mxu0 %v1143
        %1164 = vmatprep.subr.bf16.mxu0 0
        %1165 = vmatpush1.bf16.msra.mxu0 %v1144
        %1166 = vmatprep.subr.bf16.mxu0 0
        %1167 = vmatpush1.bf16.msra.mxu0 %v1145
        %1168 = vmatprep.subr.bf16.mxu0 0
        %1169 = vmatpush1.bf16.msra.mxu0 %v1146
        %1170 = vmatprep.subr.bf16.mxu0 0
        %1171 = vmatpush1.bf16.msra.mxu0 %v1147
        %1172 = vmatprep.subr.bf16.mxu0 0
        %1173 = vmatpush1.bf16.msra.mxu0 0
        %1174 = vmatprep.subr.bf16.mxu0 0
        %1175 = vmatpush1.bf16.msra.mxu0 0
        %1176 = vmatprep.subr.bf16.mxu0 0
        %1177 = vmatpush1.bf16.msra.mxu0 0
        %1178 = vmatprep.subr.bf16.mxu0 0
        %1179 = vmatpush1.bf16.msra.mxu0 0
        %1180 = vmatprep.subr.bf16.mxu0 0
        %1181 = vmatpush1.bf16.msra.mxu0 0
        %1182 = vmatprep.subr.bf16.mxu0 0
        %1183 = vmatpush1.bf16.msra.mxu0 0
        %1184 = vmatprep.subr.bf16.mxu0 0
        %1185 = vmatpush1.bf16.msra.mxu0 0
        %1186 = vmatprep.subr.bf16.mxu0 0
        %1187 = vmatpush1.bf16.msra.mxu0 0
        %1188 = vmatprep.mubr.bf16.mxu0 0
        %1189 = vmatmul.mubr.bf16.gmra.mrb[0].mxu0 %v624
        %v1190 = vpop.f32.mrb[0].mxu0
        %v1191 = vadd.f32 0.0, %v1190
        %v1192 = vpop.f32.mrb[0].mxu0
        %v1193 = vpop.f32.mrb[0].mxu0
        %v1194 = vpop.f32.mrb[0].mxu0
        %1195 = vdwg.mxu0
        %v1212 = vunpack.c.l.b16 %v708
        %v1213 = vunpack.c.l.b16 %v709
        %v1214 = vunpack.c.l.b16 %v710
        %v1215 = vunpack.c.l.b16 %v711
        %v1216 = vunpack.c.l.b16 %v712
        %v1217 = vunpack.c.l.b16 %v713
        %v1218 = vunpack.c.l.b16 %v714
        %v1219 = vunpack.c.l.b16 %v715
        %v1220 = vunpack.c.l.b16 %v716
        %v1221 = vunpack.c.l.b16 %v717
        %v1222 = vunpack.c.l.b16 %v718
        %v1223 = vunpack.c.l.b16 %v719
        %v1224 = vunpack.c.l.b16 %v720
        %v1225 = vunpack.c.l.b16 %v721
        %v1226 = vunpack.c.l.b16 %v722
        %v1227 = vunpack.c.l.b16 %v723
        %v1228 = vpack.c.b16 %v1213, %v1212
        %v1229 = vpack.c.b16 %v1215, %v1214
        %v1230 = vpack.c.b16 %v1217, %v1216
        %v1231 = vpack.c.b16 %v1219, %v1218
        %v1232 = vpack.c.b16 %v1221, %v1220
        %v1233 = vpack.c.b16 %v1223, %v1222
        %v1234 = vpack.c.b16 %v1225, %v1224
        %v1235 = vpack.c.b16 %v1227, %v1226
        %1244 = vmatprep.subr.bf16.mxu0 0
        %1245 = vmatpush1.bf16.msra.mxu0 %v1228
        %1246 = vmatprep.subr.bf16.mxu0 0
        %1247 = vmatpush1.bf16.msra.mxu0 %v1229
        %1248 = vmatprep.subr.bf16.mxu0 0
        %1249 = vmatpush1.bf16.msra.mxu0 %v1230
        %1250 = vmatprep.subr.bf16.mxu0 0
        %1251 = vmatpush1.bf16.msra.mxu0 %v1231
        %1252 = vmatprep.subr.bf16.mxu0 0
        %1253 = vmatpush1.bf16.msra.mxu0 %v1232
        %1254 = vmatprep.subr.bf16.mxu0 0
        %1255 = vmatpush1.bf16.msra.mxu0 %v1233
        %1256 = vmatprep.subr.bf16.mxu0 0
        %1257 = vmatpush1.bf16.msra.mxu0 %v1234
        %1258 = vmatprep.subr.bf16.mxu0 0
        %1259 = vmatpush1.bf16.msra.mxu0 %v1235
        %1260 = vmatprep.subr.bf16.mxu0 0
        %1261 = vmatpush1.bf16.msra.mxu0 0
        %1262 = vmatprep.subr.bf16.mxu0 0
        %1263 = vmatpush1.bf16.msra.mxu0 0
        %1264 = vmatprep.subr.bf16.mxu0 0
        %1265 = vmatpush1.bf16.msra.mxu0 0
        %1266 = vmatprep.subr.bf16.mxu0 0
        %1267 = vmatpush1.bf16.msra.mxu0 0
        %1268 = vmatprep.subr.bf16.mxu0 0
        %1269 = vmatpush1.bf16.msra.mxu0 0
        %1270 = vmatprep.subr.bf16.mxu0 0
        %1271 = vmatpush1.bf16.msra.mxu0 0
        %1272 = vmatprep.subr.bf16.mxu0 0
        %1273 = vmatpush1.bf16.msra.mxu0 0
        %1274 = vmatprep.subr.bf16.mxu0 0
        %1275 = vmatpush1.bf16.msra.mxu0 0
        %1276 = vmatprep.mubr.bf16.mxu0 0
        %1277 = vmatmul.mubr.bf16.gmra.mrb[0].mxu0 %v625
        %v1278 = vpop.f32.mrb[0].mxu0
        %v1279 = vadd.f32 0.0, %v1278
        %v1280 = vpop.f32.mrb[0].mxu0
        %v1281 = vpop.f32.mrb[0].mxu0
        %v1282 = vpop.f32.mrb[0].mxu0
        %1283 = vdwg.mxu0
        %v1300 = vunpack.c.l.b16 %v724
        %v1301 = vunpack.c.l.b16 %v725
        %v1302 = vunpack.c.l.b16 %v726
        %v1303 = vunpack.c.l.b16 %v727
        %v1304 = vunpack.c.l.b16 %v728
        %v1305 = vunpack.c.l.b16 %v729
        %v1306 = vunpack.c.l.b16 %v730
        %v1307 = vunpack.c.l.b16 %v731
        %v1308 = vunpack.c.l.b16 %v732
        %v1309 = vunpack.c.l.b16 %v733
        %v1310 = vunpack.c.l.b16 %v734
        %v1311 = vunpack.c.l.b16 %v735
        %v1312 = vunpack.c.l.b16 %v736
        %v1313 = vunpack.c.l.b16 %v737
        %v1314 = vunpack.c.l.b16 %v738
        %v1315 = vunpack.c.l.b16 %v739
        %v1316 = vpack.c.b16 %v1301, %v1300
        %v1317 = vpack.c.b16 %v1303, %v1302
        %v1318 = vpack.c.b16 %v1305, %v1304
        %v1319 = vpack.c.b16 %v1307, %v1306
        %v1320 = vpack.c.b16 %v1309, %v1308
        %v1321 = vpack.c.b16 %v1311, %v1310
        %v1322 = vpack.c.b16 %v1313, %v1312
        %v1323 = vpack.c.b16 %v1315, %v1314
        %1332 = vmatprep.subr.bf16.mxu0 0
        %1333 = vmatpush1.bf16.msra.mxu0 %v1316
        %1334 = vmatprep.subr.bf16.mxu0 0
        %1335 = vmatpush1.bf16.msra.mxu0 %v1317
        %1336 = vmatprep.subr.bf16.mxu0 0
        %1337 = vmatpush1.bf16.msra.mxu0 %v1318
        %1338 = vmatprep.subr.bf16.mxu0 0
        %1339 = vmatpush1.bf16.msra.mxu0 %v1319
        %1340 = vmatprep.subr.bf16.mxu0 0
        %1341 = vmatpush1.bf16.msra.mxu0 %v1320
        %1342 = vmatprep.subr.bf16.mxu0 0
        %1343 = vmatpush1.bf16.msra.mxu0 %v1321
        %1344 = vmatprep.subr.bf16.mxu0 0
        %1345 = vmatpush1.bf16.msra.mxu0 %v1322
        %1346 = vmatprep.subr.bf16.mxu0 0
        %1347 = vmatpush1.bf16.msra.mxu0 %v1323
        %1348 = vmatprep.subr.bf16.mxu0 0
        %1349 = vmatpush1.bf16.msra.mxu0 0
        %1350 = vmatprep.subr.bf16.mxu0 0
        %1351 = vmatpush1.bf16.msra.mxu0 0
        %1352 = vmatprep.subr.bf16.mxu0 0
        %1353 = vmatpush1.bf16.msra.mxu0 0
        %1354 = vmatprep.subr.bf16.mxu0 0
        %1355 = vmatpush1.bf16.msra.mxu0 0
        %1356 = vmatprep.subr.bf16.mxu0 0
        %1357 = vmatpush1.bf16.msra.mxu0 0
        %1358 = vmatprep.subr.bf16.mxu0 0
        %1359 = vmatpush1.bf16.msra.mxu0 0
        %1360 = vmatprep.subr.bf16.mxu0 0
        %1361 = vmatpush1.bf16.msra.mxu0 0
        %1362 = vmatprep.subr.bf16.mxu0 0
        %1363 = vmatpush1.bf16.msra.mxu0 0
        %1364 = vmatprep.mubr.bf16.mxu0 0
        %1365 = vmatmul.mubr.bf16.gmra.mrb[0].mxu0 %v626
        %v1366 = vpop.f32.mrb[0].mxu0
        %v1367 = vadd.f32 0.0, %v1366
        %v1368 = vpop.f32.mrb[0].mxu0
        %v1369 = vpop.f32.mrb[0].mxu0
        %v1370 = vpop.f32.mrb[0].mxu0
        %1371 = vdwg.mxu0
        %v1388 = vunpack.c.l.b16 %v740
        %v1389 = vunpack.c.l.b16 %v741
        %v1390 = vunpack.c.l.b16 %v742
        %v1391 = vunpack.c.l.b16 %v743
        %v1392 = vunpack.c.l.b16 %v744
        %v1393 = vunpack.c.l.b16 %v745
        %v1394 = vunpack.c.l.b16 %v746
        %v1395 = vunpack.c.l.b16 %v747
        %v1396 = vunpack.c.l.b16 %v748
        %v1397 = vunpack.c.l.b16 %v749
        %v1398 = vunpack.c.l.b16 %v750
        %v1399 = vunpack.c.l.b16 %v751
        %v1400 = vunpack.c.l.b16 %v752
        %v1401 = vunpack.c.l.b16 %v753
        %v1402 = vunpack.c.l.b16 %v754
        %v1403 = vunpack.c.l.b16 %v755
        %v1404 = vpack.c.b16 %v1389, %v1388
        %v1405 = vpack.c.b16 %v1391, %v1390
        %v1406 = vpack.c.b16 %v1393, %v1392
        %v1407 = vpack.c.b16 %v1395, %v1394
        %v1408 = vpack.c.b16 %v1397, %v1396
        %v1409 = vpack.c.b16 %v1399, %v1398
        %v1410 = vpack.c.b16 %v1401, %v1400
        %v1411 = vpack.c.b16 %v1403, %v1402
        %1420 = vmatprep.subr.bf16.mxu0 0
        %1421 = vmatpush1.bf16.msra.mxu0 %v1404
        %1422 = vmatprep.subr.bf16.mxu0 0
        %1423 = vmatpush1.bf16.msra.mxu0 %v1405
        %1424 = vmatprep.subr.bf16.mxu0 0
        %1425 = vmatpush1.bf16.msra.mxu0 %v1406
        %1426 = vmatprep.subr.bf16.mxu0 0
        %1427 = vmatpush1.bf16.msra.mxu0 %v1407
        %1428 = vmatprep.subr.bf16.mxu0 0
        %1429 = vmatpush1.bf16.msra.mxu0 %v1408
        %1430 = vmatprep.subr.bf16.mxu0 0
        %1431 = vmatpush1.bf16.msra.mxu0 %v1409
        %1432 = vmatprep.subr.bf16.mxu0 0
        %1433 = vmatpush1.bf16.msra.mxu0 %v1410
        %1434 = vmatprep.subr.bf16.mxu0 0
        %1435 = vmatpush1.bf16.msra.mxu0 %v1411
        %1436 = vmatprep.subr.bf16.mxu0 0
        %1437 = vmatpush1.bf16.msra.mxu0 0
        %1438 = vmatprep.subr.bf16.mxu0 0
        %1439 = vmatpush1.bf16.msra.mxu0 0
        %1440 = vmatprep.subr.bf16.mxu0 0
        %1441 = vmatpush1.bf16.msra.mxu0 0
        %1442 = vmatprep.subr.bf16.mxu0 0
        %1443 = vmatpush1.bf16.msra.mxu0 0
        %1444 = vmatprep.subr.bf16.mxu0 0
        %1445 = vmatpush1.bf16.msra.mxu0 0
        %1446 = vmatprep.subr.bf16.mxu0 0
        %1447 = vmatpush1.bf16.msra.mxu0 0
        %1448 = vmatprep.subr.bf16.mxu0 0
        %1449 = vmatpush1.bf16.msra.mxu0 0
        %1450 = vmatprep.subr.bf16.mxu0 0
        %1451 = vmatpush1.bf16.msra.mxu0 0
        %1452 = vmatprep.mubr.bf16.mxu0 0
        %1453 = vmatmul.mubr.bf16.gmra.mrb[0].mxu0 %v627
        %v1454 = vpop.f32.mrb[0].mxu0
        %v1455 = vadd.f32 0.0, %v1454
        %v1456 = vpop.f32.mrb[0].mxu0
        %v1457 = vpop.f32.mrb[0].mxu0
        %v1458 = vpop.f32.mrb[0].mxu0
        %1459 = vdwg.mxu0
        %v1460 = vmax.f32 %v605, 1.0
        %v1461 = vmax.f32 %v607, 1.0
        %v1462 = vmax.f32 %v609, 1.0
        %v1463 = vmax.f32 %v611, 1.0
        %v1464 = vmax.f32 %v613, 1.0
        %v1465 = vmax.f32 %v615, 1.0
        %v1466 = vmax.f32 %v617, 1.0
        %v1467 = vmax.f32 %v619, 1.0
        %v1468 = vrcp.pop %v1460
        %v1469 = vmul.f32 0.088388346, %v1468
        %v1470 = vrcp.pop %v1461
        %v1471 = vmul.f32 0.088388346, %v1470
        %v1472 = vrcp.pop %v1462
        %v1473 = vmul.f32 0.088388346, %v1472
        %v1474 = vrcp.pop %v1463
        %v1475 = vmul.f32 0.088388346, %v1474
        %v1476 = vrcp.pop %v1464
        %v1477 = vmul.f32 0.088388346, %v1476
        %v1478 = vrcp.pop %v1465
        %v1479 = vmul.f32 0.088388346, %v1478
        %v1480 = vrcp.pop %v1466
        %v1481 = vmul.f32 0.088388346, %v1480
        %v1482 = vrcp.pop %v1467
        %v1483 = vmul.f32 0.088388346, %v1482
        %v1484 = vmul.f32 %v839, %v1469
        %v1485 = vmul.f32 %v927, %v1471
        %v1486 = vmul.f32 %v1015, %v1473
        %v1487 = vmul.f32 %v1103, %v1475
        %v1488 = vmul.f32 %v1191, %v1477
        %v1489 = vmul.f32 %v1279, %v1479
        %v1490 = vmul.f32 %v1367, %v1481
        %v1491 = vmul.f32 %v1455, %v1483
        %v1492 = vpack.c.bf16 %v1484, %v1484
        %v1493 = vpack.c.bf16 %v1485, %v1485
        %v1494 = vpack.c.bf16 %v1486, %v1486
        %v1495 = vpack.c.bf16 %v1487, %v1487
        %v1496 = vpack.c.bf16 %v1488, %v1488
        %v1497 = vpack.c.bf16 %v1489, %v1489
        %v1498 = vpack.c.bf16 %v1490, %v1490
        %v1499 = vpack.c.bf16 %v1491, %v1491
        %v1500 = vld [vmem:[%s382] sm:$0xf]
        %v1501 = vld [vmem:[%s382 + $0x4] sm:$0xf]
        %v1502 = vld [vmem:[%s382 + $0x8] sm:$0xf]
        %v1503 = vld [vmem:[%s382 + $0xc] sm:$0xf]
        %v1504 = vld [vmem:[%s382 + $0x10] sm:$0xf]
        %v1505 = vld [vmem:[%s382 + $0x14] sm:$0xf]
        %v1506 = vld [vmem:[%s382 + $0x18] sm:$0xf]
        %v1507 = vld [vmem:[%s382 + $0x1c] sm:$0xf]
        %v1508 = vld [vmem:[%s382 + $0x20] sm:$0xf]
        %v1509 = vld [vmem:[%s382 + $0x24] sm:$0xf]
        %v1510 = vld [vmem:[%s382 + $0x28] sm:$0xf]
        %v1511 = vld [vmem:[%s382 + $0x2c] sm:$0xf]
        %v1512 = vld [vmem:[%s382 + $0x30] sm:$0xf]
        %v1513 = vld [vmem:[%s382 + $0x34] sm:$0xf]
        %v1514 = vld [vmem:[%s382 + $0x38] sm:$0xf]
        %v1515 = vld [vmem:[%s382 + $0x3c] sm:$0xf]
        %v1516 = vld [vmem:[%s382 + $0x40] sm:$0xf]
        %v1517 = vld [vmem:[%s382 + $0x44] sm:$0xf]
        %v1518 = vld [vmem:[%s382 + $0x48] sm:$0xf]
        %v1519 = vld [vmem:[%s382 + $0x4c] sm:$0xf]
        %v1520 = vld [vmem:[%s382 + $0x50] sm:$0xf]
        %v1521 = vld [vmem:[%s382 + $0x54] sm:$0xf]
        %v1522 = vld [vmem:[%s382 + $0x58] sm:$0xf]
        %v1523 = vld [vmem:[%s382 + $0x5c] sm:$0xf]
        %v1524 = vld [vmem:[%s382 + $0x60] sm:$0xf]
        %v1525 = vld [vmem:[%s382 + $0x64] sm:$0xf]
        %v1526 = vld [vmem:[%s382 + $0x68] sm:$0xf]
        %v1527 = vld [vmem:[%s382 + $0x6c] sm:$0xf]
        %v1528 = vld [vmem:[%s382 + $0x70] sm:$0xf]
        %v1529 = vld [vmem:[%s382 + $0x74] sm:$0xf]
        %v1530 = vld [vmem:[%s382 + $0x78] sm:$0xf]
        %v1531 = vld [vmem:[%s382 + $0x7c] sm:$0xf]
        %v1532 = vld [vmem:[%s382 + $0x80] sm:$0xf]
        %v1533 = vld [vmem:[%s382 + $0x84] sm:$0xf]
        %v1534 = vld [vmem:[%s382 + $0x88] sm:$0xf]
        %v1535 = vld [vmem:[%s382 + $0x8c] sm:$0xf]
        %v1536 = vld [vmem:[%s382 + $0x90] sm:$0xf]
        %v1537 = vld [vmem:[%s382 + $0x94] sm:$0xf]
        %v1538 = vld [vmem:[%s382 + $0x98] sm:$0xf]
        %v1539 = vld [vmem:[%s382 + $0x9c] sm:$0xf]
        %v1540 = vld [vmem:[%s382 + $0xa0] sm:$0xf]
        %v1541 = vld [vmem:[%s382 + $0xa4] sm:$0xf]
        %v1542 = vld [vmem:[%s382 + $0xa8] sm:$0xf]
        %v1543 = vld [vmem:[%s382 + $0xac] sm:$0xf]
        %v1544 = vld [vmem:[%s382 + $0xb0] sm:$0xf]
        %v1545 = vld [vmem:[%s382 + $0xb4] sm:$0xf]
        %v1546 = vld [vmem:[%s382 + $0xb8] sm:$0xf]
        %v1547 = vld [vmem:[%s382 + $0xbc] sm:$0xf]
        %v1548 = vld [vmem:[%s382 + $0xc0] sm:$0xf]
        %v1549 = vld [vmem:[%s382 + $0xc4] sm:$0xf]
        %v1550 = vld [vmem:[%s382 + $0xc8] sm:$0xf]
        %v1551 = vld [vmem:[%s382 + $0xcc] sm:$0xf]
        %v1552 = vld [vmem:[%s382 + $0xd0] sm:$0xf]
        %v1553 = vld [vmem:[%s382 + $0xd4] sm:$0xf]
        %v1554 = vld [vmem:[%s382 + $0xd8] sm:$0xf]
        %v1555 = vld [vmem:[%s382 + $0xdc] sm:$0xf]
        %v1556 = vld [vmem:[%s382 + $0xe0] sm:$0xf]
        %v1557 = vld [vmem:[%s382 + $0xe4] sm:$0xf]
        %v1558 = vld [vmem:[%s382 + $0xe8] sm:$0xf]
        %v1559 = vld [vmem:[%s382 + $0xec] sm:$0xf]
        %v1560 = vld [vmem:[%s382 + $0xf0] sm:$0xf]
        %v1561 = vld [vmem:[%s382 + $0xf4] sm:$0xf]
        %v1562 = vld [vmem:[%s382 + $0xf8] sm:$0xf]
        %v1563 = vld [vmem:[%s382 + $0xfc] sm:$0xf]
        %v1564 = vld [vmem:[%s382 + $0x100] sm:$0xf]
        %v1565 = vld [vmem:[%s382 + $0x104] sm:$0xf]
        %v1566 = vld [vmem:[%s382 + $0x108] sm:$0xf]
        %v1567 = vld [vmem:[%s382 + $0x10c] sm:$0xf]
        %v1568 = vld [vmem:[%s382 + $0x110] sm:$0xf]
        %v1569 = vld [vmem:[%s382 + $0x114] sm:$0xf]
        %v1570 = vld [vmem:[%s382 + $0x118] sm:$0xf]
        %v1571 = vld [vmem:[%s382 + $0x11c] sm:$0xf]
        %v1572 = vld [vmem:[%s382 + $0x120] sm:$0xf]
        %v1573 = vld [vmem:[%s382 + $0x124] sm:$0xf]
        %v1574 = vld [vmem:[%s382 + $0x128] sm:$0xf]
        %v1575 = vld [vmem:[%s382 + $0x12c] sm:$0xf]
        %v1576 = vld [vmem:[%s382 + $0x130] sm:$0xf]
        %v1577 = vld [vmem:[%s382 + $0x134] sm:$0xf]
        %v1578 = vld [vmem:[%s382 + $0x138] sm:$0xf]
        %v1579 = vld [vmem:[%s382 + $0x13c] sm:$0xf]
        %v1580 = vld [vmem:[%s382 + $0x140] sm:$0xf]
        %v1581 = vld [vmem:[%s382 + $0x144] sm:$0xf]
        %v1582 = vld [vmem:[%s382 + $0x148] sm:$0xf]
        %v1583 = vld [vmem:[%s382 + $0x14c] sm:$0xf]
        %v1584 = vld [vmem:[%s382 + $0x150] sm:$0xf]
        %v1585 = vld [vmem:[%s382 + $0x154] sm:$0xf]
        %v1586 = vld [vmem:[%s382 + $0x158] sm:$0xf]
        %v1587 = vld [vmem:[%s382 + $0x15c] sm:$0xf]
        %v1588 = vld [vmem:[%s382 + $0x160] sm:$0xf]
        %v1589 = vld [vmem:[%s382 + $0x164] sm:$0xf]
        %v1590 = vld [vmem:[%s382 + $0x168] sm:$0xf]
        %v1591 = vld [vmem:[%s382 + $0x16c] sm:$0xf]
        %v1592 = vld [vmem:[%s382 + $0x170] sm:$0xf]
        %v1593 = vld [vmem:[%s382 + $0x174] sm:$0xf]
        %v1594 = vld [vmem:[%s382 + $0x178] sm:$0xf]
        %v1595 = vld [vmem:[%s382 + $0x17c] sm:$0xf]
        %v1596 = vld [vmem:[%s382 + $0x180] sm:$0xf]
        %v1597 = vld [vmem:[%s382 + $0x184] sm:$0xf]
        %v1598 = vld [vmem:[%s382 + $0x188] sm:$0xf]
        %v1599 = vld [vmem:[%s382 + $0x18c] sm:$0xf]
        %v1600 = vld [vmem:[%s382 + $0x190] sm:$0xf]
        %v1601 = vld [vmem:[%s382 + $0x194] sm:$0xf]
        %v1602 = vld [vmem:[%s382 + $0x198] sm:$0xf]
        %v1603 = vld [vmem:[%s382 + $0x19c] sm:$0xf]
        %v1604 = vld [vmem:[%s382 + $0x1a0] sm:$0xf]
        %v1605 = vld [vmem:[%s382 + $0x1a4] sm:$0xf]
        %v1606 = vld [vmem:[%s382 + $0x1a8] sm:$0xf]
        %v1607 = vld [vmem:[%s382 + $0x1ac] sm:$0xf]
        %v1608 = vld [vmem:[%s382 + $0x1b0] sm:$0xf]
        %v1609 = vld [vmem:[%s382 + $0x1b4] sm:$0xf]
        %v1610 = vld [vmem:[%s382 + $0x1b8] sm:$0xf]
        %v1611 = vld [vmem:[%s382 + $0x1bc] sm:$0xf]
        %v1612 = vld [vmem:[%s382 + $0x1c0] sm:$0xf]
        %v1613 = vld [vmem:[%s382 + $0x1c4] sm:$0xf]
        %v1614 = vld [vmem:[%s382 + $0x1c8] sm:$0xf]
        %v1615 = vld [vmem:[%s382 + $0x1cc] sm:$0xf]
        %v1616 = vld [vmem:[%s382 + $0x1d0] sm:$0xf]
        %v1617 = vld [vmem:[%s382 + $0x1d4] sm:$0xf]
        %v1618 = vld [vmem:[%s382 + $0x1d8] sm:$0xf]
        %v1619 = vld [vmem:[%s382 + $0x1dc] sm:$0xf]
        %v1620 = vld [vmem:[%s382 + $0x1e0] sm:$0xf]
        %v1621 = vld [vmem:[%s382 + $0x1e4] sm:$0xf]
        %v1622 = vld [vmem:[%s382 + $0x1e8] sm:$0xf]
        %v1623 = vld [vmem:[%s382 + $0x1ec] sm:$0xf]
        %v1624 = vld [vmem:[%s382 + $0x1f0] sm:$0xf]
        %v1625 = vld [vmem:[%s382 + $0x1f4] sm:$0xf]
        %v1626 = vld [vmem:[%s382 + $0x1f8] sm:$0xf]
        %v1627 = vld [vmem:[%s382 + $0x1fc] sm:$0xf]
        %v1644 = vunpack.c.l.b16 %v1500
        %v1645 = vunpack.c.l.b16 %v1501
        %v1646 = vunpack.c.l.b16 %v1502
        %v1647 = vunpack.c.l.b16 %v1503
        %v1648 = vunpack.c.l.b16 %v1504
        %v1649 = vunpack.c.l.b16 %v1505
        %v1650 = vunpack.c.l.b16 %v1506
        %v1651 = vunpack.c.l.b16 %v1507
        %v1652 = vunpack.c.l.b16 %v1508
        %v1653 = vunpack.c.l.b16 %v1509
        %v1654 = vunpack.c.l.b16 %v1510
        %v1655 = vunpack.c.l.b16 %v1511
        %v1656 = vunpack.c.l.b16 %v1512
        %v1657 = vunpack.c.l.b16 %v1513
        %v1658 = vunpack.c.l.b16 %v1514
        %v1659 = vunpack.c.l.b16 %v1515
        %v1660 = vpack.c.b16 %v1645, %v1644
        %v1661 = vpack.c.b16 %v1647, %v1646
        %v1662 = vpack.c.b16 %v1649, %v1648
        %v1663 = vpack.c.b16 %v1651, %v1650
        %v1664 = vpack.c.b16 %v1653, %v1652
        %v1665 = vpack.c.b16 %v1655, %v1654
        %v1666 = vpack.c.b16 %v1657, %v1656
        %v1667 = vpack.c.b16 %v1659, %v1658
        %1676 = vmatprep.subr.bf16.mxu0 0
        %1677 = vmatpush1.bf16.xpose.msra.mxu0 %v1660
        %1678 = vmatprep.subr.bf16.mxu0 0
        %1679 = vmatpush1.bf16.xpose.msra.mxu0 %v1661
        %1680 = vmatprep.subr.bf16.mxu0 0
        %1681 = vmatpush1.bf16.xpose.msra.mxu0 %v1662
        %1682 = vmatprep.subr.bf16.mxu0 0
        %1683 = vmatpush1.bf16.xpose.msra.mxu0 %v1663
        %1684 = vmatprep.subr.bf16.mxu0 0
        %1685 = vmatpush1.bf16.xpose.msra.mxu0 %v1664
        %1686 = vmatprep.subr.bf16.mxu0 0
        %1687 = vmatpush1.bf16.xpose.msra.mxu0 %v1665
        %1688 = vmatprep.subr.bf16.mxu0 0
        %1689 = vmatpush1.bf16.xpose.msra.mxu0 %v1666
        %1690 = vmatprep.subr.bf16.mxu0 0
        %1691 = vmatpush1.bf16.xpose.msra.mxu0 %v1667
        %1692 = vmatprep.subr.bf16.mxu0 0
        %1693 = vmatpush1.bf16.xpose.msra.mxu0 0
        %1694 = vmatprep.subr.bf16.mxu0 0
        %1695 = vmatpush1.bf16.xpose.msra.mxu0 0
        %1696 = vmatprep.subr.bf16.mxu0 0
        %1697 = vmatpush1.bf16.xpose.msra.mxu0 0
        %1698 = vmatprep.subr.bf16.mxu0 0
        %1699 = vmatpush1.bf16.xpose.msra.mxu0 0
        %1700 = vmatprep.subr.bf16.mxu0 0
        %1701 = vmatpush1.bf16.xpose.msra.mxu0 0
        %1702 = vmatprep.subr.bf16.mxu0 0
        %1703 = vmatpush1.bf16.xpose.msra.mxu0 0
        %1704 = vmatprep.subr.bf16.mxu0 0
        %1705 = vmatpush1.bf16.xpose.msra.mxu0 0
        %1706 = vmatprep.subr.bf16.mxu0 0
        %1707 = vmatpush1.bf16.xpose.msra.mxu0 0
        %1708 = vmatprep.mubr.bf16.mxu0 0
        %1709 = vmatmul.mubr.bf16.gmra.mrb[0].mxu0 %v1492
        %v1710 = vpop.f32.mrb[0].mxu0
        %v1711 = vadd.f32 0.0, %v1710
        %v1712 = vpop.f32.mrb[0].mxu0
        %v1713 = vpop.f32.mrb[0].mxu0
        %v1714 = vpop.f32.mrb[0].mxu0
        %1715 = vdwg.mxu0
        %v1732 = vunpack.c.l.b16 %v1516
        %v1733 = vunpack.c.l.b16 %v1517
        %v1734 = vunpack.c.l.b16 %v1518
        %v1735 = vunpack.c.l.b16 %v1519
        %v1736 = vunpack.c.l.b16 %v1520
        %v1737 = vunpack.c.l.b16 %v1521
        %v1738 = vunpack.c.l.b16 %v1522
        %v1739 = vunpack.c.l.b16 %v1523
        %v1740 = vunpack.c.l.b16 %v1524
        %v1741 = vunpack.c.l.b16 %v1525
        %v1742 = vunpack.c.l.b16 %v1526
        %v1743 = vunpack.c.l.b16 %v1527
        %v1744 = vunpack.c.l.b16 %v1528
        %v1745 = vunpack.c.l.b16 %v1529
        %v1746 = vunpack.c.l.b16 %v1530
        %v1747 = vunpack.c.l.b16 %v1531
        %v1748 = vpack.c.b16 %v1733, %v1732
        %v1749 = vpack.c.b16 %v1735, %v1734
        %v1750 = vpack.c.b16 %v1737, %v1736
        %v1751 = vpack.c.b16 %v1739, %v1738
        %v1752 = vpack.c.b16 %v1741, %v1740
        %v1753 = vpack.c.b16 %v1743, %v1742
        %v1754 = vpack.c.b16 %v1745, %v1744
        %v1755 = vpack.c.b16 %v1747, %v1746
        %1764 = vmatprep.subr.bf16.mxu0 0
        %1765 = vmatpush1.bf16.xpose.msra.mxu0 %v1748
        %1766 = vmatprep.subr.bf16.mxu0 0
        %1767 = vmatpush1.bf16.xpose.msra.mxu0 %v1749
        %1768 = vmatprep.subr.bf16.mxu0 0
        %1769 = vmatpush1.bf16.xpose.msra.mxu0 %v1750
        %1770 = vmatprep.subr.bf16.mxu0 0
        %1771 = vmatpush1.bf16.xpose.msra.mxu0 %v1751
        %1772 = vmatprep.subr.bf16.mxu0 0
        %1773 = vmatpush1.bf16.xpose.msra.mxu0 %v1752
        %1774 = vmatprep.subr.bf16.mxu0 0
        %1775 = vmatpush1.bf16.xpose.msra.mxu0 %v1753
        %1776 = vmatprep.subr.bf16.mxu0 0
        %1777 = vmatpush1.bf16.xpose.msra.mxu0 %v1754
        %1778 = vmatprep.subr.bf16.mxu0 0
        %1779 = vmatpush1.bf16.xpose.msra.mxu0 %v1755
        %1780 = vmatprep.subr.bf16.mxu0 0
        %1781 = vmatpush1.bf16.xpose.msra.mxu0 0
        %1782 = vmatprep.subr.bf16.mxu0 0
        %1783 = vmatpush1.bf16.xpose.msra.mxu0 0
        %1784 = vmatprep.subr.bf16.mxu0 0
        %1785 = vmatpush1.bf16.xpose.msra.mxu0 0
        %1786 = vmatprep.subr.bf16.mxu0 0
        %1787 = vmatpush1.bf16.xpose.msra.mxu0 0
        %1788 = vmatprep.subr.bf16.mxu0 0
        %1789 = vmatpush1.bf16.xpose.msra.mxu0 0
        %1790 = vmatprep.subr.bf16.mxu0 0
        %1791 = vmatpush1.bf16.xpose.msra.mxu0 0
        %1792 = vmatprep.subr.bf16.mxu0 0
        %1793 = vmatpush1.bf16.xpose.msra.mxu0 0
        %1794 = vmatprep.subr.bf16.mxu0 0
        %1795 = vmatpush1.bf16.xpose.msra.mxu0 0
        %1796 = vmatprep.mubr.bf16.mxu0 0
        %1797 = vmatmul.mubr.bf16.gmra.mrb[0].mxu0 %v1493
        %v1798 = vpop.f32.mrb[0].mxu0
        %v1799 = vadd.f32 0.0, %v1798
        %v1800 = vpop.f32.mrb[0].mxu0
        %v1801 = vpop.f32.mrb[0].mxu0
        %v1802 = vpop.f32.mrb[0].mxu0
        %1803 = vdwg.mxu0
        %v1820 = vunpack.c.l.b16 %v1532
        %v1821 = vunpack.c.l.b16 %v1533
        %v1822 = vunpack.c.l.b16 %v1534
        %v1823 = vunpack.c.l.b16 %v1535
        %v1824 = vunpack.c.l.b16 %v1536
        %v1825 = vunpack.c.l.b16 %v1537
        %v1826 = vunpack.c.l.b16 %v1538
        %v1827 = vunpack.c.l.b16 %v1539
        %v1828 = vunpack.c.l.b16 %v1540
        %v1829 = vunpack.c.l.b16 %v1541
        %v1830 = vunpack.c.l.b16 %v1542
        %v1831 = vunpack.c.l.b16 %v1543
        %v1832 = vunpack.c.l.b16 %v1544
        %v1833 = vunpack.c.l.b16 %v1545
        %v1834 = vunpack.c.l.b16 %v1546
        %v1835 = vunpack.c.l.b16 %v1547
        %v1836 = vpack.c.b16 %v1821, %v1820
        %v1837 = vpack.c.b16 %v1823, %v1822
        %v1838 = vpack.c.b16 %v1825, %v1824
        %v1839 = vpack.c.b16 %v1827, %v1826
        %v1840 = vpack.c.b16 %v1829, %v1828
        %v1841 = vpack.c.b16 %v1831, %v1830
        %v1842 = vpack.c.b16 %v1833, %v1832
        %v1843 = vpack.c.b16 %v1835, %v1834
        %1852 = vmatprep.subr.bf16.mxu0 0
        %1853 = vmatpush1.bf16.xpose.msra.mxu0 %v1836
        %1854 = vmatprep.subr.bf16.mxu0 0
        %1855 = vmatpush1.bf16.xpose.msra.mxu0 %v1837
        %1856 = vmatprep.subr.bf16.mxu0 0
        %1857 = vmatpush1.bf16.xpose.msra.mxu0 %v1838
        %1858 = vmatprep.subr.bf16.mxu0 0
        %1859 = vmatpush1.bf16.xpose.msra.mxu0 %v1839
        %1860 = vmatprep.subr.bf16.mxu0 0
        %1861 = vmatpush1.bf16.xpose.msra.mxu0 %v1840
        %1862 = vmatprep.subr.bf16.mxu0 0
        %1863 = vmatpush1.bf16.xpose.msra.mxu0 %v1841
        %1864 = vmatprep.subr.bf16.mxu0 0
        %1865 = vmatpush1.bf16.xpose.msra.mxu0 %v1842
        %1866 = vmatprep.subr.bf16.mxu0 0
        %1867 = vmatpush1.bf16.xpose.msra.mxu0 %v1843
        %1868 = vmatprep.subr.bf16.mxu0 0
        %1869 = vmatpush1.bf16.xpose.msra.mxu0 0
        %1870 = vmatprep.subr.bf16.mxu0 0
        %1871 = vmatpush1.bf16.xpose.msra.mxu0 0
        %1872 = vmatprep.subr.bf16.mxu0 0
        %1873 = vmatpush1.bf16.xpose.msra.mxu0 0
        %1874 = vmatprep.subr.bf16.mxu0 0
        %1875 = vmatpush1.bf16.xpose.msra.mxu0 0
        %1876 = vmatprep.subr.bf16.mxu0 0
        %1877 = vmatpush1.bf16.xpose.msra.mxu0 0
        %1878 = vmatprep.subr.bf16.mxu0 0
        %1879 = vmatpush1.bf16.xpose.msra.mxu0 0
        %1880 = vmatprep.subr.bf16.mxu0 0
        %1881 = vmatpush1.bf16.xpose.msra.mxu0 0
        %1882 = vmatprep.subr.bf16.mxu0 0
        %1883 = vmatpush1.bf16.xpose.msra.mxu0 0
        %1884 = vmatprep.mubr.bf16.mxu0 0
        %1885 = vmatmul.mubr.bf16.gmra.mrb[0].mxu0 %v1494
        %v1886 = vpop.f32.mrb[0].mxu0
        %v1887 = vadd.f32 0.0, %v1886
        %v1888 = vpop.f32.mrb[0].mxu0
        %v1889 = vpop.f32.mrb[0].mxu0
        %v1890 = vpop.f32.mrb[0].mxu0
        %1891 = vdwg.mxu0
        %v1908 = vunpack.c.l.b16 %v1548
        %v1909 = vunpack.c.l.b16 %v1549
        %v1910 = vunpack.c.l.b16 %v1550
        %v1911 = vunpack.c.l.b16 %v1551
        %v1912 = vunpack.c.l.b16 %v1552
        %v1913 = vunpack.c.l.b16 %v1553
        %v1914 = vunpack.c.l.b16 %v1554
        %v1915 = vunpack.c.l.b16 %v1555
        %v1916 = vunpack.c.l.b16 %v1556
        %v1917 = vunpack.c.l.b16 %v1557
        %v1918 = vunpack.c.l.b16 %v1558
        %v1919 = vunpack.c.l.b16 %v1559
        %v1920 = vunpack.c.l.b16 %v1560
        %v1921 = vunpack.c.l.b16 %v1561
        %v1922 = vunpack.c.l.b16 %v1562
        %v1923 = vunpack.c.l.b16 %v1563
        %v1924 = vpack.c.b16 %v1909, %v1908
        %v1925 = vpack.c.b16 %v1911, %v1910
        %v1926 = vpack.c.b16 %v1913, %v1912
        %v1927 = vpack.c.b16 %v1915, %v1914
        %v1928 = vpack.c.b16 %v1917, %v1916
        %v1929 = vpack.c.b16 %v1919, %v1918
        %v1930 = vpack.c.b16 %v1921, %v1920
        %v1931 = vpack.c.b16 %v1923, %v1922
        %1940 = vmatprep.subr.bf16.mxu0 0
        %1941 = vmatpush1.bf16.xpose.msra.mxu0 %v1924
        %1942 = vmatprep.subr.bf16.mxu0 0
        %1943 = vmatpush1.bf16.xpose.msra.mxu0 %v1925
        %1944 = vmatprep.subr.bf16.mxu0 0
        %1945 = vmatpush1.bf16.xpose.msra.mxu0 %v1926
        %1946 = vmatprep.subr.bf16.mxu0 0
        %1947 = vmatpush1.bf16.xpose.msra.mxu0 %v1927
        %1948 = vmatprep.subr.bf16.mxu0 0
        %1949 = vmatpush1.bf16.xpose.msra.mxu0 %v1928
        %1950 = vmatprep.subr.bf16.mxu0 0
        %1951 = vmatpush1.bf16.xpose.msra.mxu0 %v1929
        %1952 = vmatprep.subr.bf16.mxu0 0
        %1953 = vmatpush1.bf16.xpose.msra.mxu0 %v1930
        %1954 = vmatprep.subr.bf16.mxu0 0
        %1955 = vmatpush1.bf16.xpose.msra.mxu0 %v1931
        %1956 = vmatprep.subr.bf16.mxu0 0
        %1957 = vmatpush1.bf16.xpose.msra.mxu0 0
        %1958 = vmatprep.subr.bf16.mxu0 0
        %1959 = vmatpush1.bf16.xpose.msra.mxu0 0
        %1960 = vmatprep.subr.bf16.mxu0 0
        %1961 = vmatpush1.bf16.xpose.msra.mxu0 0
        %1962 = vmatprep.subr.bf16.mxu0 0
        %1963 = vmatpush1.bf16.xpose.msra.mxu0 0
        %1964 = vmatprep.subr.bf16.mxu0 0
        %1965 = vmatpush1.bf16.xpose.msra.mxu0 0
        %1966 = vmatprep.subr.bf16.mxu0 0
        %1967 = vmatpush1.bf16.xpose.msra.mxu0 0
        %1968 = vmatprep.subr.bf16.mxu0 0
        %1969 = vmatpush1.bf16.xpose.msra.mxu0 0
        %1970 = vmatprep.subr.bf16.mxu0 0
        %1971 = vmatpush1.bf16.xpose.msra.mxu0 0
        %1972 = vmatprep.mubr.bf16.mxu0 0
        %1973 = vmatmul.mubr.bf16.gmra.mrb[0].mxu0 %v1495
        %v1974 = vpop.f32.mrb[0].mxu0
        %v1975 = vadd.f32 0.0, %v1974
        %v1976 = vpop.f32.mrb[0].mxu0
        %v1977 = vpop.f32.mrb[0].mxu0
        %v1978 = vpop.f32.mrb[0].mxu0
        %1979 = vdwg.mxu0
        %v1996 = vunpack.c.l.b16 %v1564
        %v1997 = vunpack.c.l.b16 %v1565
        %v1998 = vunpack.c.l.b16 %v1566
        %v1999 = vunpack.c.l.b16 %v1567
        %v2000 = vunpack.c.l.b16 %v1568
        %v2001 = vunpack.c.l.b16 %v1569
        %v2002 = vunpack.c.l.b16 %v1570
        %v2003 = vunpack.c.l.b16 %v1571
        %v2004 = vunpack.c.l.b16 %v1572
        %v2005 = vunpack.c.l.b16 %v1573
        %v2006 = vunpack.c.l.b16 %v1574
        %v2007 = vunpack.c.l.b16 %v1575
        %v2008 = vunpack.c.l.b16 %v1576
        %v2009 = vunpack.c.l.b16 %v1577
        %v2010 = vunpack.c.l.b16 %v1578
        %v2011 = vunpack.c.l.b16 %v1579
        %v2012 = vpack.c.b16 %v1997, %v1996
        %v2013 = vpack.c.b16 %v1999, %v1998
        %v2014 = vpack.c.b16 %v2001, %v2000
        %v2015 = vpack.c.b16 %v2003, %v2002
        %v2016 = vpack.c.b16 %v2005, %v2004
        %v2017 = vpack.c.b16 %v2007, %v2006
        %v2018 = vpack.c.b16 %v2009, %v2008
        %v2019 = vpack.c.b16 %v2011, %v2010
        %2028 = vmatprep.subr.bf16.mxu0 0
        %2029 = vmatpush1.bf16.xpose.msra.mxu0 %v2012
        %2030 = vmatprep.subr.bf16.mxu0 0
        %2031 = vmatpush1.bf16.xpose.msra.mxu0 %v2013
        %2032 = vmatprep.subr.bf16.mxu0 0
        %2033 = vmatpush1.bf16.xpose.msra.mxu0 %v2014
        %2034 = vmatprep.subr.bf16.mxu0 0
        %2035 = vmatpush1.bf16.xpose.msra.mxu0 %v2015
        %2036 = vmatprep.subr.bf16.mxu0 0
        %2037 = vmatpush1.bf16.xpose.msra.mxu0 %v2016
        %2038 = vmatprep.subr.bf16.mxu0 0
        %2039 = vmatpush1.bf16.xpose.msra.mxu0 %v2017
        %2040 = vmatprep.subr.bf16.mxu0 0
        %2041 = vmatpush1.bf16.xpose.msra.mxu0 %v2018
        %2042 = vmatprep.subr.bf16.mxu0 0
        %2043 = vmatpush1.bf16.xpose.msra.mxu0 %v2019
        %2044 = vmatprep.subr.bf16.mxu0 0
        %2045 = vmatpush1.bf16.xpose.msra.mxu0 0
        %2046 = vmatprep.subr.bf16.mxu0 0
        %2047 = vmatpush1.bf16.xpose.msra.mxu0 0
        %2048 = vmatprep.subr.bf16.mxu0 0
        %2049 = vmatpush1.bf16.xpose.msra.mxu0 0
        %2050 = vmatprep.subr.bf16.mxu0 0
        %2051 = vmatpush1.bf16.xpose.msra.mxu0 0
        %2052 = vmatprep.subr.bf16.mxu0 0
        %2053 = vmatpush1.bf16.xpose.msra.mxu0 0
        %2054 = vmatprep.subr.bf16.mxu0 0
        %2055 = vmatpush1.bf16.xpose.msra.mxu0 0
        %2056 = vmatprep.subr.bf16.mxu0 0
        %2057 = vmatpush1.bf16.xpose.msra.mxu0 0
        %2058 = vmatprep.subr.bf16.mxu0 0
        %2059 = vmatpush1.bf16.xpose.msra.mxu0 0
        %2060 = vmatprep.mubr.bf16.mxu0 0
        %2061 = vmatmul.mubr.bf16.gmra.mrb[0].mxu0 %v1496
        %v2062 = vpop.f32.mrb[0].mxu0
        %v2063 = vadd.f32 0.0, %v2062
        %v2064 = vpop.f32.mrb[0].mxu0
        %v2065 = vpop.f32.mrb[0].mxu0
        %v2066 = vpop.f32.mrb[0].mxu0
        %2067 = vdwg.mxu0
        %v2084 = vunpack.c.l.b16 %v1580
        %v2085 = vunpack.c.l.b16 %v1581
        %v2086 = vunpack.c.l.b16 %v1582
        %v2087 = vunpack.c.l.b16 %v1583
        %v2088 = vunpack.c.l.b16 %v1584
        %v2089 = vunpack.c.l.b16 %v1585
        %v2090 = vunpack.c.l.b16 %v1586
        %v2091 = vunpack.c.l.b16 %v1587
        %v2092 = vunpack.c.l.b16 %v1588
        %v2093 = vunpack.c.l.b16 %v1589
        %v2094 = vunpack.c.l.b16 %v1590
        %v2095 = vunpack.c.l.b16 %v1591
        %v2096 = vunpack.c.l.b16 %v1592
        %v2097 = vunpack.c.l.b16 %v1593
        %v2098 = vunpack.c.l.b16 %v1594
        %v2099 = vunpack.c.l.b16 %v1595
        %v2100 = vpack.c.b16 %v2085, %v2084
        %v2101 = vpack.c.b16 %v2087, %v2086
        %v2102 = vpack.c.b16 %v2089, %v2088
        %v2103 = vpack.c.b16 %v2091, %v2090
        %v2104 = vpack.c.b16 %v2093, %v2092
        %v2105 = vpack.c.b16 %v2095, %v2094
        %v2106 = vpack.c.b16 %v2097, %v2096
        %v2107 = vpack.c.b16 %v2099, %v2098
        %2116 = vmatprep.subr.bf16.mxu0 0
        %2117 = vmatpush1.bf16.xpose.msra.mxu0 %v2100
        %2118 = vmatprep.subr.bf16.mxu0 0
        %2119 = vmatpush1.bf16.xpose.msra.mxu0 %v2101
        %2120 = vmatprep.subr.bf16.mxu0 0
        %2121 = vmatpush1.bf16.xpose.msra.mxu0 %v2102
        %2122 = vmatprep.subr.bf16.mxu0 0
        %2123 = vmatpush1.bf16.xpose.msra.mxu0 %v2103
        %2124 = vmatprep.subr.bf16.mxu0 0
        %2125 = vmatpush1.bf16.xpose.msra.mxu0 %v2104
        %2126 = vmatprep.subr.bf16.mxu0 0
        %2127 = vmatpush1.bf16.xpose.msra.mxu0 %v2105
        %2128 = vmatprep.subr.bf16.mxu0 0
        %2129 = vmatpush1.bf16.xpose.msra.mxu0 %v2106
        %2130 = vmatprep.subr.bf16.mxu0 0
        %2131 = vmatpush1.bf16.xpose.msra.mxu0 %v2107
        %2132 = vmatprep.subr.bf16.mxu0 0
        %2133 = vmatpush1.bf16.xpose.msra.mxu0 0
        %2134 = vmatprep.subr.bf16.mxu0 0
        %2135 = vmatpush1.bf16.xpose.msra.mxu0 0
        %2136 = vmatprep.subr.bf16.mxu0 0
        %2137 = vmatpush1.bf16.xpose.msra.mxu0 0
        %2138 = vmatprep.subr.bf16.mxu0 0
        %2139 = vmatpush1.bf16.xpose.msra.mxu0 0
        %2140 = vmatprep.subr.bf16.mxu0 0
        %2141 = vmatpush1.bf16.xpose.msra.mxu0 0
        %2142 = vmatprep.subr.bf16.mxu0 0
        %2143 = vmatpush1.bf16.xpose.msra.mxu0 0
        %2144 = vmatprep.subr.bf16.mxu0 0
        %2145 = vmatpush1.bf16.xpose.msra.mxu0 0
        %2146 = vmatprep.subr.bf16.mxu0 0
        %2147 = vmatpush1.bf16.xpose.msra.mxu0 0
        %2148 = vmatprep.mubr.bf16.mxu0 0
        %2149 = vmatmul.mubr.bf16.gmra.mrb[0].mxu0 %v1497
        %v2150 = vpop.f32.mrb[0].mxu0
        %v2151 = vadd.f32 0.0, %v2150
        %v2152 = vpop.f32.mrb[0].mxu0
        %v2153 = vpop.f32.mrb[0].mxu0
        %v2154 = vpop.f32.mrb[0].mxu0
        %2155 = vdwg.mxu0
        %v2172 = vunpack.c.l.b16 %v1596
        %v2173 = vunpack.c.l.b16 %v1597
        %v2174 = vunpack.c.l.b16 %v1598
        %v2175 = vunpack.c.l.b16 %v1599
        %v2176 = vunpack.c.l.b16 %v1600
        %v2177 = vunpack.c.l.b16 %v1601
        %v2178 = vunpack.c.l.b16 %v1602
        %v2179 = vunpack.c.l.b16 %v1603
        %v2180 = vunpack.c.l.b16 %v1604
        %v2181 = vunpack.c.l.b16 %v1605
        %v2182 = vunpack.c.l.b16 %v1606
        %v2183 = vunpack.c.l.b16 %v1607
        %v2184 = vunpack.c.l.b16 %v1608
        %v2185 = vunpack.c.l.b16 %v1609
        %v2186 = vunpack.c.l.b16 %v1610
        %v2187 = vunpack.c.l.b16 %v1611
        %v2188 = vpack.c.b16 %v2173, %v2172
        %v2189 = vpack.c.b16 %v2175, %v2174
        %v2190 = vpack.c.b16 %v2177, %v2176
        %v2191 = vpack.c.b16 %v2179, %v2178
        %v2192 = vpack.c.b16 %v2181, %v2180
        %v2193 = vpack.c.b16 %v2183, %v2182
        %v2194 = vpack.c.b16 %v2185, %v2184
        %v2195 = vpack.c.b16 %v2187, %v2186
        %2204 = vmatprep.subr.bf16.mxu0 0
        %2205 = vmatpush1.bf16.xpose.msra.mxu0 %v2188
        %2206 = vmatprep.subr.bf16.mxu0 0
        %2207 = vmatpush1.bf16.xpose.msra.mxu0 %v2189
        %2208 = vmatprep.subr.bf16.mxu0 0
        %2209 = vmatpush1.bf16.xpose.msra.mxu0 %v2190
        %2210 = vmatprep.subr.bf16.mxu0 0
        %2211 = vmatpush1.bf16.xpose.msra.mxu0 %v2191
        %2212 = vmatprep.subr.bf16.mxu0 0
        %2213 = vmatpush1.bf16.xpose.msra.mxu0 %v2192
        %2214 = vmatprep.subr.bf16.mxu0 0
        %2215 = vmatpush1.bf16.xpose.msra.mxu0 %v2193
        %2216 = vmatprep.subr.bf16.mxu0 0
        %2217 = vmatpush1.bf16.xpose.msra.mxu0 %v2194
        %2218 = vmatprep.subr.bf16.mxu0 0
        %2219 = vmatpush1.bf16.xpose.msra.mxu0 %v2195
        %2220 = vmatprep.subr.bf16.mxu0 0
        %2221 = vmatpush1.bf16.xpose.msra.mxu0 0
        %2222 = vmatprep.subr.bf16.mxu0 0
        %2223 = vmatpush1.bf16.xpose.msra.mxu0 0
        %2224 = vmatprep.subr.bf16.mxu0 0
        %2225 = vmatpush1.bf16.xpose.msra.mxu0 0
        %2226 = vmatprep.subr.bf16.mxu0 0
        %2227 = vmatpush1.bf16.xpose.msra.mxu0 0
        %2228 = vmatprep.subr.bf16.mxu0 0
        %2229 = vmatpush1.bf16.xpose.msra.mxu0 0
        %2230 = vmatprep.subr.bf16.mxu0 0
        %2231 = vmatpush1.bf16.xpose.msra.mxu0 0
        %2232 = vmatprep.subr.bf16.mxu0 0
        %2233 = vmatpush1.bf16.xpose.msra.mxu0 0
        %2234 = vmatprep.subr.bf16.mxu0 0
        %2235 = vmatpush1.bf16.xpose.msra.mxu0 0
        %2236 = vmatprep.mubr.bf16.mxu0 0
        %2237 = vmatmul.mubr.bf16.gmra.mrb[0].mxu0 %v1498
        %v2238 = vpop.f32.mrb[0].mxu0
        %v2239 = vadd.f32 0.0, %v2238
        %v2240 = vpop.f32.mrb[0].mxu0
        %v2241 = vpop.f32.mrb[0].mxu0
        %v2242 = vpop.f32.mrb[0].mxu0
        %2243 = vdwg.mxu0
        %v2260 = vunpack.c.l.b16 %v1612
        %v2261 = vunpack.c.l.b16 %v1613
        %v2262 = vunpack.c.l.b16 %v1614
        %v2263 = vunpack.c.l.b16 %v1615
        %v2264 = vunpack.c.l.b16 %v1616
        %v2265 = vunpack.c.l.b16 %v1617
        %v2266 = vunpack.c.l.b16 %v1618
        %v2267 = vunpack.c.l.b16 %v1619
        %v2268 = vunpack.c.l.b16 %v1620
        %v2269 = vunpack.c.l.b16 %v1621
        %v2270 = vunpack.c.l.b16 %v1622
        %v2271 = vunpack.c.l.b16 %v1623
        %v2272 = vunpack.c.l.b16 %v1624
        %v2273 = vunpack.c.l.b16 %v1625
        %v2274 = vunpack.c.l.b16 %v1626
        %v2275 = vunpack.c.l.b16 %v1627
        %v2276 = vpack.c.b16 %v2261, %v2260
        %v2277 = vpack.c.b16 %v2263, %v2262
        %v2278 = vpack.c.b16 %v2265, %v2264
        %v2279 = vpack.c.b16 %v2267, %v2266
        %v2280 = vpack.c.b16 %v2269, %v2268
        %v2281 = vpack.c.b16 %v2271, %v2270
        %v2282 = vpack.c.b16 %v2273, %v2272
        %v2283 = vpack.c.b16 %v2275, %v2274
        %2292 = vmatprep.subr.bf16.mxu0 0
        %2293 = vmatpush1.bf16.xpose.msra.mxu0 %v2276
        %2294 = vmatprep.subr.bf16.mxu0 0
        %2295 = vmatpush1.bf16.xpose.msra.mxu0 %v2277
        %2296 = vmatprep.subr.bf16.mxu0 0
        %2297 = vmatpush1.bf16.xpose.msra.mxu0 %v2278
        %2298 = vmatprep.subr.bf16.mxu0 0
        %2299 = vmatpush1.bf16.xpose.msra.mxu0 %v2279
        %2300 = vmatprep.subr.bf16.mxu0 0
        %2301 = vmatpush1.bf16.xpose.msra.mxu0 %v2280
        %2302 = vmatprep.subr.bf16.mxu0 0
        %2303 = vmatpush1.bf16.xpose.msra.mxu0 %v2281
        %2304 = vmatprep.subr.bf16.mxu0 0
        %2305 = vmatpush1.bf16.xpose.msra.mxu0 %v2282
        %2306 = vmatprep.subr.bf16.mxu0 0
        %2307 = vmatpush1.bf16.xpose.msra.mxu0 %v2283
        %2308 = vmatprep.subr.bf16.mxu0 0
        %2309 = vmatpush1.bf16.xpose.msra.mxu0 0
        %2310 = vmatprep.subr.bf16.mxu0 0
        %2311 = vmatpush1.bf16.xpose.msra.mxu0 0
        %2312 = vmatprep.subr.bf16.mxu0 0
        %2313 = vmatpush1.bf16.xpose.msra.mxu0 0
        %2314 = vmatprep.subr.bf16.mxu0 0
        %2315 = vmatpush1.bf16.xpose.msra.mxu0 0
        %2316 = vmatprep.subr.bf16.mxu0 0
        %2317 = vmatpush1.bf16.xpose.msra.mxu0 0
        %2318 = vmatprep.subr.bf16.mxu0 0
        %2319 = vmatpush1.bf16.xpose.msra.mxu0 0
        %2320 = vmatprep.subr.bf16.mxu0 0
        %2321 = vmatpush1.bf16.xpose.msra.mxu0 0
        %2322 = vmatprep.subr.bf16.mxu0 0
        %2323 = vmatpush1.bf16.xpose.msra.mxu0 0
        %2324 = vmatprep.mubr.bf16.mxu0 0
        %2325 = vmatmul.mubr.bf16.gmra.mrb[0].mxu0 %v1499
        %v2326 = vpop.f32.mrb[0].mxu0
        %v2327 = vadd.f32 0.0, %v2326
        %v2328 = vpop.f32.mrb[0].mxu0
        %v2329 = vpop.f32.mrb[0].mxu0
        %v2330 = vpop.f32.mrb[0].mxu0
        %2331 = vdwg.mxu0
        %2332 = vst [vmem:[%s470] sm:$0xff] %v1711
        %2333 = vst [vmem:[%s470 + $0x8] sm:$0xff] %v1799
        %2334 = vst [vmem:[%s470 + $0x10] sm:$0xff] %v1887
        %2335 = vst [vmem:[%s470 + $0x18] sm:$0xff] %v1975
        %2336 = vst [vmem:[%s470 + $0x20] sm:$0xff] %v2063
        %2337 = vst [vmem:[%s470 + $0x28] sm:$0xff] %v2151
        %2338 = vst [vmem:[%s470 + $0x30] sm:$0xff] %v2239
        %2339 = vst [vmem:[%s470 + $0x38] sm:$0xff] %v2327
        %v2340 = vld [vmem:[%s400] sm:$0x1]
        %v2341 = vld [vmem:[%s400 + $0x1] sm:$0x1]
        %v2342 = vld [vmem:[%s400 + $0x2] sm:$0x1]
        %v2343 = vld [vmem:[%s400 + $0x3] sm:$0x1]
        %v2344 = vld [vmem:[%s400 + $0x4] sm:$0x1]
        %v2345 = vld [vmem:[%s400 + $0x5] sm:$0x1]
        %v2346 = vld [vmem:[%s400 + $0x6] sm:$0x1]
        %v2347 = vld [vmem:[%s400 + $0x7] sm:$0x1]
        %v2348 = vsub.s32 %v2340, 1
        %v2349 = vsub.s32 %v2341, 1
        %v2350 = vsub.s32 %v2342, 1
        %v2351 = vsub.s32 %v2343, 1
        %v2352 = vsub.s32 %v2344, 1
        %v2353 = vsub.s32 %v2345, 1
        %v2354 = vsub.s32 %v2346, 1
        %v2355 = vsub.s32 %v2347, 1
        %vm2356 = vcmp.gt.s32.totalorder %v2348, 0
        %v2357 = vsel %vm2356, %v2348, 0
        %vm2358 = vcmp.gt.s32.totalorder %v2349, 0
        %v2359 = vsel %vm2358, %v2349, 0
        %vm2360 = vcmp.gt.s32.totalorder %v2350, 0
        %v2361 = vsel %vm2360, %v2350, 0
        %vm2362 = vcmp.gt.s32.totalorder %v2351, 0
        %v2363 = vsel %vm2362, %v2351, 0
        %vm2364 = vcmp.gt.s32.totalorder %v2352, 0
        %v2365 = vsel %vm2364, %v2352, 0
        %vm2366 = vcmp.gt.s32.totalorder %v2353, 0
        %v2367 = vsel %vm2366, %v2353, 0
        %vm2368 = vcmp.gt.s32.totalorder %v2354, 0
        %v2369 = vsel %vm2368, %v2354, 0
        %vm2370 = vcmp.gt.s32.totalorder %v2355, 0
        %v2371 = vsel %vm2370, %v2355, 0
        %v2372 = vld [vmem:[%s391] sm:$0x1]
        %v2373 = vld [vmem:[%s391 + $0x1] sm:$0x1]
        %v2374 = vld [vmem:[%s391 + $0x2] sm:$0x1]
        %v2375 = vld [vmem:[%s391 + $0x3] sm:$0x1]
        %v2376 = vld [vmem:[%s391 + $0x4] sm:$0x1]
        %v2377 = vld [vmem:[%s391 + $0x5] sm:$0x1]
        %v2378 = vld [vmem:[%s391 + $0x6] sm:$0x1]
        %v2379 = vld [vmem:[%s391 + $0x7] sm:$0x1]
        %vm2380 = vcmp.lt.s32.totalorder %v490, 4
        %v2381 = vsel %vm2380, %v1711, -1e+30
        %v2382 = vsel %vm2380, %v1799, -1e+30
        %v2383 = vsel %vm2380, %v1887, -1e+30
        %v2384 = vsel %vm2380, %v1975, -1e+30
        %v2385 = vsel %vm2380, %v2063, -1e+30
        %v2386 = vsel %vm2380, %v2151, -1e+30
        %v2387 = vsel %vm2380, %v2239, -1e+30
        %v2388 = vsel %vm2380, %v2327, -1e+30
        %v2389 = vrot.slane %v2381, 4
        %v2390 = vmax.f32 %v2381, %v2389
        %v2391 = vrot.slane %v2390, 2
        %v2392 = vmax.f32 %v2390, %v2391
        %v2393 = vrot.slane %v2392, 1
        %v2394 = vmax.f32 %v2392, %v2393
        %v2395 = vrot.slane %v2382, 4
        %v2396 = vmax.f32 %v2382, %v2395
        %v2397 = vrot.slane %v2396, 2
        %v2398 = vmax.f32 %v2396, %v2397
        %v2399 = vrot.slane %v2398, 1
        %v2400 = vmax.f32 %v2398, %v2399
        %v2401 = vrot.slane %v2383, 4
        %v2402 = vmax.f32 %v2383, %v2401
        %v2403 = vrot.slane %v2402, 2
        %v2404 = vmax.f32 %v2402, %v2403
        %v2405 = vrot.slane %v2404, 1
        %v2406 = vmax.f32 %v2404, %v2405
        %v2407 = vrot.slane %v2384, 4
        %v2408 = vmax.f32 %v2384, %v2407
        %v2409 = vrot.slane %v2408, 2
        %v2410 = vmax.f32 %v2408, %v2409
        %v2411 = vrot.slane %v2410, 1
        %v2412 = vmax.f32 %v2410, %v2411
        %v2413 = vrot.slane %v2385, 4
        %v2414 = vmax.f32 %v2385, %v2413
        %v2415 = vrot.slane %v2414, 2
        %v2416 = vmax.f32 %v2414, %v2415
        %v2417 = vrot.slane %v2416, 1
        %v2418 = vmax.f32 %v2416, %v2417
        %v2419 = vrot.slane %v2386, 4
        %v2420 = vmax.f32 %v2386, %v2419
        %v2421 = vrot.slane %v2420, 2
        %v2422 = vmax.f32 %v2420, %v2421
        %v2423 = vrot.slane %v2422, 1
        %v2424 = vmax.f32 %v2422, %v2423
        %v2425 = vrot.slane %v2387, 4
        %v2426 = vmax.f32 %v2387, %v2425
        %v2427 = vrot.slane %v2426, 2
        %v2428 = vmax.f32 %v2426, %v2427
        %v2429 = vrot.slane %v2428, 1
        %v2430 = vmax.f32 %v2428, %v2429
        %v2431 = vrot.slane %v2388, 4
        %v2432 = vmax.f32 %v2388, %v2431
        %v2433 = vrot.slane %v2432, 2
        %v2434 = vmax.f32 %v2432, %v2433
        %v2435 = vrot.slane %v2434, 1
        %v2436 = vmax.f32 %v2434, %v2435
        %v2437 = vsub.f32 %v2381, %v2394
        %v2438 = vsub.f32 %v2382, %v2400
        %v2439 = vsub.f32 %v2383, %v2406
        %v2440 = vsub.f32 %v2384, %v2412
        %v2441 = vsub.f32 %v2385, %v2418
        %v2442 = vsub.f32 %v2386, %v2424
        %v2443 = vsub.f32 %v2387, %v2430
        %v2444 = vsub.f32 %v2388, %v2436
        %v2445 = vmul.f32 %v2437, 1.442695
        %v2446 = vpow.pop %v2445
        %v2447 = vmul.f32 %v2438, 1.442695
        %v2448 = vpow.pop %v2447
        %v2449 = vmul.f32 %v2439, 1.442695
        %v2450 = vpow.pop %v2449
        %v2451 = vmul.f32 %v2440, 1.442695
        %v2452 = vpow.pop %v2451
        %v2453 = vmul.f32 %v2441, 1.442695
        %v2454 = vpow.pop %v2453
        %v2455 = vmul.f32 %v2442, 1.442695
        %v2456 = vpow.pop %v2455
        %v2457 = vmul.f32 %v2443, 1.442695
        %v2458 = vpow.pop %v2457
        %v2459 = vmul.f32 %v2444, 1.442695
        %v2460 = vpow.pop %v2459
        %v2461 = vrot.slane %v2446, 4
        %v2462 = vadd.f32 %v2446, %v2461
        %v2463 = vrot.slane %v2462, 2
        %v2464 = vadd.f32 %v2462, %v2463
        %v2465 = vrot.slane %v2464, 1
        %v2466 = vadd.f32 %v2464, %v2465
        %v2467 = vrot.slane %v2448, 4
        %v2468 = vadd.f32 %v2448, %v2467
        %v2469 = vrot.slane %v2468, 2
        %v2470 = vadd.f32 %v2468, %v2469
        %v2471 = vrot.slane %v2470, 1
        %v2472 = vadd.f32 %v2470, %v2471
        %v2473 = vrot.slane %v2450, 4
        %v2474 = vadd.f32 %v2450, %v2473
        %v2475 = vrot.slane %v2474, 2
        %v2476 = vadd.f32 %v2474, %v2475
        %v2477 = vrot.slane %v2476, 1
        %v2478 = vadd.f32 %v2476, %v2477
        %v2479 = vrot.slane %v2452, 4
        %v2480 = vadd.f32 %v2452, %v2479
        %v2481 = vrot.slane %v2480, 2
        %v2482 = vadd.f32 %v2480, %v2481
        %v2483 = vrot.slane %v2482, 1
        %v2484 = vadd.f32 %v2482, %v2483
        %v2485 = vrot.slane %v2454, 4
        %v2486 = vadd.f32 %v2454, %v2485
        %v2487 = vrot.slane %v2486, 2
        %v2488 = vadd.f32 %v2486, %v2487
        %v2489 = vrot.slane %v2488, 1
        %v2490 = vadd.f32 %v2488, %v2489
        %v2491 = vrot.slane %v2456, 4
        %v2492 = vadd.f32 %v2456, %v2491
        %v2493 = vrot.slane %v2492, 2
        %v2494 = vadd.f32 %v2492, %v2493
        %v2495 = vrot.slane %v2494, 1
        %v2496 = vadd.f32 %v2494, %v2495
        %v2497 = vrot.slane %v2458, 4
        %v2498 = vadd.f32 %v2458, %v2497
        %v2499 = vrot.slane %v2498, 2
        %v2500 = vadd.f32 %v2498, %v2499
        %v2501 = vrot.slane %v2500, 1
        %v2502 = vadd.f32 %v2500, %v2501
        %v2503 = vrot.slane %v2460, 4
        %v2504 = vadd.f32 %v2460, %v2503
        %v2505 = vrot.slane %v2504, 2
        %v2506 = vadd.f32 %v2504, %v2505
        %v2507 = vrot.slane %v2506, 1
        %v2508 = vadd.f32 %v2506, %v2507
        %v2509 = vlog2.pop %v2466
        %v2510 = vmul.f32 %v2509, 0.6931472
        %v2511 = vlog2.pop %v2472
        %v2512 = vmul.f32 %v2511, 0.6931472
        %v2513 = vlog2.pop %v2478
        %v2514 = vmul.f32 %v2513, 0.6931472
        %v2515 = vlog2.pop %v2484
        %v2516 = vmul.f32 %v2515, 0.6931472
        %v2517 = vlog2.pop %v2490
        %v2518 = vmul.f32 %v2517, 0.6931472
        %v2519 = vlog2.pop %v2496
        %v2520 = vmul.f32 %v2519, 0.6931472
        %v2521 = vlog2.pop %v2502
        %v2522 = vmul.f32 %v2521, 0.6931472
        %v2523 = vlog2.pop %v2508
        %v2524 = vmul.f32 %v2523, 0.6931472
        %v2525 = vadd.f32 %v2510, %v2394
        %v2526 = vadd.f32 %v2512, %v2400
        %v2527 = vadd.f32 %v2514, %v2406
        %v2528 = vadd.f32 %v2516, %v2412
        %v2529 = vadd.f32 %v2518, %v2418
        %v2530 = vadd.f32 %v2520, %v2424
        %v2531 = vadd.f32 %v2522, %v2430
        %v2532 = vadd.f32 %v2524, %v2436
        %v2533 = vlaneseq
        %v2534 = vshrl.u32 %v2533, 7
        %v2535 = vsub.s32 0, %v2534
        %v2536 = vrot.slane %v2357, %v2535
        %v2537 = vlaneseq
        %v2538 = vshrl.u32 %v2537, 7
        %v2539 = vsub.s32 0, %v2538
        %v2540 = vrot.slane %v2359, %v2539
        %v2541 = vlaneseq
        %v2542 = vshrl.u32 %v2541, 7
        %v2543 = vsub.s32 0, %v2542
        %v2544 = vrot.slane %v2361, %v2543
        %v2545 = vlaneseq
        %v2546 = vshrl.u32 %v2545, 7
        %v2547 = vsub.s32 0, %v2546
        %v2548 = vrot.slane %v2363, %v2547
        %v2549 = vlaneseq
        %v2550 = vshrl.u32 %v2549, 7
        %v2551 = vsub.s32 0, %v2550
        %v2552 = vrot.slane %v2365, %v2551
        %v2553 = vlaneseq
        %v2554 = vshrl.u32 %v2553, 7
        %v2555 = vsub.s32 0, %v2554
        %v2556 = vrot.slane %v2367, %v2555
        %v2557 = vlaneseq
        %v2558 = vshrl.u32 %v2557, 7
        %v2559 = vsub.s32 0, %v2558
        %v2560 = vrot.slane %v2369, %v2559
        %v2561 = vlaneseq
        %v2562 = vshrl.u32 %v2561, 7
        %v2563 = vsub.s32 0, %v2562
        %v2564 = vrot.slane %v2371, %v2563
        %vm2565 = vcmp.eq.s32.totalorder %v490, %v2536
        %vm2566 = vcmp.eq.s32.totalorder %v490, %v2540
        %vm2567 = vcmp.eq.s32.totalorder %v490, %v2544
        %vm2568 = vcmp.eq.s32.totalorder %v490, %v2548
        %vm2569 = vcmp.eq.s32.totalorder %v490, %v2552
        %vm2570 = vcmp.eq.s32.totalorder %v490, %v2556
        %vm2571 = vcmp.eq.s32.totalorder %v490, %v2560
        %vm2572 = vcmp.eq.s32.totalorder %v490, %v2564
        %v2573 = vsel %vm2565, %v1711, 0.0
        %v2574 = vsel %vm2566, %v1799, 0.0
        %v2575 = vsel %vm2567, %v1887, 0.0
        %v2576 = vsel %vm2568, %v1975, 0.0
        %v2577 = vsel %vm2569, %v2063, 0.0
        %v2578 = vsel %vm2570, %v2151, 0.0
        %v2579 = vsel %vm2571, %v2239, 0.0
        %v2580 = vsel %vm2572, %v2327, 0.0
        %v2581 = vrot.slane %v2573, 4
        %v2582 = vadd.f32 %v2573, %v2581
        %v2583 = vrot.slane %v2582, 2
        %v2584 = vadd.f32 %v2582, %v2583
        %v2585 = vrot.slane %v2584, 1
        %v2586 = vadd.f32 %v2584, %v2585
        %v2587 = vrot.slane %v2574, 4
        %v2588 = vadd.f32 %v2574, %v2587
        %v2589 = vrot.slane %v2588, 2
        %v2590 = vadd.f32 %v2588, %v2589
        %v2591 = vrot.slane %v2590, 1
        %v2592 = vadd.f32 %v2590, %v2591
        %v2593 = vrot.slane %v2575, 4
        %v2594 = vadd.f32 %v2575, %v2593
        %v2595 = vrot.slane %v2594, 2
        %v2596 = vadd.f32 %v2594, %v2595
        %v2597 = vrot.slane %v2596, 1
        %v2598 = vadd.f32 %v2596, %v2597
        %v2599 = vrot.slane %v2576, 4
        %v2600 = vadd.f32 %v2576, %v2599
        %v2601 = vrot.slane %v2600, 2
        %v2602 = vadd.f32 %v2600, %v2601
        %v2603 = vrot.slane %v2602, 1
        %v2604 = vadd.f32 %v2602, %v2603
        %v2605 = vrot.slane %v2577, 4
        %v2606 = vadd.f32 %v2577, %v2605
        %v2607 = vrot.slane %v2606, 2
        %v2608 = vadd.f32 %v2606, %v2607
        %v2609 = vrot.slane %v2608, 1
        %v2610 = vadd.f32 %v2608, %v2609
        %v2611 = vrot.slane %v2578, 4
        %v2612 = vadd.f32 %v2578, %v2611
        %v2613 = vrot.slane %v2612, 2
        %v2614 = vadd.f32 %v2612, %v2613
        %v2615 = vrot.slane %v2614, 1
        %v2616 = vadd.f32 %v2614, %v2615
        %v2617 = vrot.slane %v2579, 4
        %v2618 = vadd.f32 %v2579, %v2617
        %v2619 = vrot.slane %v2618, 2
        %v2620 = vadd.f32 %v2618, %v2619
        %v2621 = vrot.slane %v2620, 1
        %v2622 = vadd.f32 %v2620, %v2621
        %v2623 = vrot.slane %v2580, 4
        %v2624 = vadd.f32 %v2580, %v2623
        %v2625 = vrot.slane %v2624, 2
        %v2626 = vadd.f32 %v2624, %v2625
        %v2627 = vrot.slane %v2626, 1
        %v2628 = vadd.f32 %v2626, %v2627
        %v2629 = vsub.f32 %v2525, %v2586
        %v2630 = vsub.f32 %v2526, %v2592
        %v2631 = vsub.f32 %v2527, %v2598
        %v2632 = vsub.f32 %v2528, %v2604
        %v2633 = vsub.f32 %v2529, %v2610
        %v2634 = vsub.f32 %v2530, %v2616
        %v2635 = vsub.f32 %v2531, %v2622
        %v2636 = vsub.f32 %v2532, %v2628
        %v2637 = vmul.f32 %v2629, %v2372
        %v2638 = vmul.f32 %v2630, %v2373
        %v2639 = vmul.f32 %v2631, %v2374
        %v2640 = vmul.f32 %v2632, %v2375
        %v2641 = vmul.f32 %v2633, %v2376
        %v2642 = vmul.f32 %v2634, %v2377
        %v2643 = vmul.f32 %v2635, %v2378
        %v2644 = vmul.f32 %v2636, %v2379
        %vm2645 = vcmask 1040384
        %v2646 = vsel %vm2645, %v2637, 0.0
        %v2647 = vsel %vm2645, %v2638, 0.0
        %v2648 = vadd.f32 %v2646, %v2647
        %v2649 = vsel %vm2645, %v2639, 0.0
        %v2650 = vadd.f32 %v2648, %v2649
        %v2651 = vsel %vm2645, %v2640, 0.0
        %v2652 = vadd.f32 %v2650, %v2651
        %v2653 = vsel %vm2645, %v2641, 0.0
        %v2654 = vadd.f32 %v2652, %v2653
        %v2655 = vsel %vm2645, %v2642, 0.0
        %v2656 = vadd.f32 %v2654, %v2655
        %v2657 = vsel %vm2645, %v2643, 0.0
        %v2658 = vadd.f32 %v2656, %v2657
        %v2659 = vsel %vm2645, %v2644, 0.0
        %v2660 = vadd.f32 %v2658, %v2659
        %2661 = vadd.xlane.f32.xlu0 %v2660
        %v2662 = vpop.xlane.xlu0 %2661
        %v2663 = vrot.slane %v2662, 4
        %v2664 = vadd.f32 %v2662, %v2663
        %v2665 = vrot.slane %v2664, 2
        %v2666 = vadd.f32 %v2664, %v2665
        %v2667 = vrot.slane %v2666, 1
        %v2668 = vadd.f32 %v2666, %v2667
        %s2669 = vtos %v2668
        %v2670 = vsel %vm2645, %v2372, 0.0
        %v2671 = vsel %vm2645, %v2373, 0.0
        %v2672 = vadd.f32 %v2670, %v2671
        %v2673 = vsel %vm2645, %v2374, 0.0
        %v2674 = vadd.f32 %v2672, %v2673
        %v2675 = vsel %vm2645, %v2375, 0.0
        %v2676 = vadd.f32 %v2674, %v2675
        %v2677 = vsel %vm2645, %v2376, 0.0
        %v2678 = vadd.f32 %v2676, %v2677
        %v2679 = vsel %vm2645, %v2377, 0.0
        %v2680 = vadd.f32 %v2678, %v2679
        %v2681 = vsel %vm2645, %v2378, 0.0
        %v2682 = vadd.f32 %v2680, %v2681
        %v2683 = vsel %vm2645, %v2379, 0.0
        %v2684 = vadd.f32 %v2682, %v2683
        %2685 = vadd.xlane.f32.xlu0 %v2684
        %v2686 = vpop.xlane.xlu0 %2685
        %v2687 = vrot.slane %v2686, 4
        %v2688 = vadd.f32 %v2686, %v2687
        %v2689 = vrot.slane %v2688, 2
        %v2690 = vadd.f32 %v2688, %v2689
        %v2691 = vrot.slane %v2690, 1
        %v2692 = vadd.f32 %v2690, %v2691
        %s2693 = vtos %v2692
        %v2694 = vrot.slane %v1711, 4
        %v2695 = vadd.f32 %v1711, %v2694
        %v2696 = vrot.slane %v2695, 2
        %v2697 = vadd.f32 %v2695, %v2696
        %v2698 = vrot.slane %v2697, 1
        %v2699 = vadd.f32 %v2697, %v2698
        %v2700 = vrot.slane %v1799, 4
        %v2701 = vadd.f32 %v1799, %v2700
        %v2702 = vrot.slane %v2701, 2
        %v2703 = vadd.f32 %v2701, %v2702
        %v2704 = vrot.slane %v2703, 1
        %v2705 = vadd.f32 %v2703, %v2704
        %v2706 = vrot.slane %v1887, 4
        %v2707 = vadd.f32 %v1887, %v2706
        %v2708 = vrot.slane %v2707, 2
        %v2709 = vadd.f32 %v2707, %v2708
        %v2710 = vrot.slane %v2709, 1
        %v2711 = vadd.f32 %v2709, %v2710
        %v2712 = vrot.slane %v1975, 4
        %v2713 = vadd.f32 %v1975, %v2712
        %v2714 = vrot.slane %v2713, 2
        %v2715 = vadd.f32 %v2713, %v2714
        %v2716 = vrot.slane %v2715, 1
        %v2717 = vadd.f32 %v2715, %v2716
        %v2718 = vrot.slane %v2063, 4
        %v2719 = vadd.f32 %v2063, %v2718
        %v2720 = vrot.slane %v2719, 2
        %v2721 = vadd.f32 %v2719, %v2720
        %v2722 = vrot.slane %v2721, 1
        %v2723 = vadd.f32 %v2721, %v2722
        %v2724 = vrot.slane %v2151, 4
        %v2725 = vadd.f32 %v2151, %v2724
        %v2726 = vrot.slane %v2725, 2
        %v2727 = vadd.f32 %v2725, %v2726
        %v2728 = vrot.slane %v2727, 1
        %v2729 = vadd.f32 %v2727, %v2728
        %v2730 = vrot.slane %v2239, 4
        %v2731 = vadd.f32 %v2239, %v2730
        %v2732 = vrot.slane %v2731, 2
        %v2733 = vadd.f32 %v2731, %v2732
        %v2734 = vrot.slane %v2733, 1
        %v2735 = vadd.f32 %v2733, %v2734
        %v2736 = vrot.slane %v2327, 4
        %v2737 = vadd.f32 %v2327, %v2736
        %v2738 = vrot.slane %v2737, 2
        %v2739 = vadd.f32 %v2737, %v2738
        %v2740 = vrot.slane %v2739, 1
        %v2741 = vadd.f32 %v2739, %v2740
        %v2742 = vmul.f32 %v2699, 0.25
        %v2743 = vmul.f32 %v2705, 0.25
        %v2744 = vmul.f32 %v2711, 0.25
        %v2745 = vmul.f32 %v2717, 0.25
        %v2746 = vmul.f32 %v2723, 0.25
        %v2747 = vmul.f32 %v2729, 0.25
        %v2748 = vmul.f32 %v2735, 0.25
        %v2749 = vmul.f32 %v2741, 0.25
        %vm2750 = vcmp.eq.s32.totalorder %v490, 0
        %v2751 = vsel %vm2750, %v1711, 0.0
        %v2752 = vsel %vm2750, %v1799, 0.0
        %v2753 = vsel %vm2750, %v1887, 0.0
        %v2754 = vsel %vm2750, %v1975, 0.0
        %v2755 = vsel %vm2750, %v2063, 0.0
        %v2756 = vsel %vm2750, %v2151, 0.0
        %v2757 = vsel %vm2750, %v2239, 0.0
        %v2758 = vsel %vm2750, %v2327, 0.0
        %v2759 = vrot.slane %v2751, 4
        %v2760 = vadd.f32 %v2751, %v2759
        %v2761 = vrot.slane %v2760, 2
        %v2762 = vadd.f32 %v2760, %v2761
        %v2763 = vrot.slane %v2762, 1
        %v2764 = vadd.f32 %v2762, %v2763
        %v2765 = vrot.slane %v2752, 4
        %v2766 = vadd.f32 %v2752, %v2765
        %v2767 = vrot.slane %v2766, 2
        %v2768 = vadd.f32 %v2766, %v2767
        %v2769 = vrot.slane %v2768, 1
        %v2770 = vadd.f32 %v2768, %v2769
        %v2771 = vrot.slane %v2753, 4
        %v2772 = vadd.f32 %v2753, %v2771
        %v2773 = vrot.slane %v2772, 2
        %v2774 = vadd.f32 %v2772, %v2773
        %v2775 = vrot.slane %v2774, 1
        %v2776 = vadd.f32 %v2774, %v2775
        %v2777 = vrot.slane %v2754, 4
        %v2778 = vadd.f32 %v2754, %v2777
        %v2779 = vrot.slane %v2778, 2
        %v2780 = vadd.f32 %v2778, %v2779
        %v2781 = vrot.slane %v2780, 1
        %v2782 = vadd.f32 %v2780, %v2781
        %v2783 = vrot.slane %v2755, 4
        %v2784 = vadd.f32 %v2755, %v2783
        %v2785 = vrot.slane %v2784, 2
        %v2786 = vadd.f32 %v2784, %v2785
        %v2787 = vrot.slane %v2786, 1
        %v2788 = vadd.f32 %v2786, %v2787
        %v2789 = vrot.slane %v2756, 4
        %v2790 = vadd.f32 %v2756, %v2789
        %v2791 = vrot.slane %v2790, 2
        %v2792 = vadd.f32 %v2790, %v2791
        %v2793 = vrot.slane %v2792, 1
        %v2794 = vadd.f32 %v2792, %v2793
        %v2795 = vrot.slane %v2757, 4
        %v2796 = vadd.f32 %v2757, %v2795
        %v2797 = vrot.slane %v2796, 2
        %v2798 = vadd.f32 %v2796, %v2797
        %v2799 = vrot.slane %v2798, 1
        %v2800 = vadd.f32 %v2798, %v2799
        %v2801 = vrot.slane %v2758, 4
        %v2802 = vadd.f32 %v2758, %v2801
        %v2803 = vrot.slane %v2802, 2
        %v2804 = vadd.f32 %v2802, %v2803
        %v2805 = vrot.slane %v2804, 1
        %v2806 = vadd.f32 %v2804, %v2805
        %v2807 = vsub.f32 %v2764, %v2742
        %v2808 = vsub.f32 %v2770, %v2743
        %v2809 = vsub.f32 %v2776, %v2744
        %v2810 = vsub.f32 %v2782, %v2745
        %v2811 = vsub.f32 %v2788, %v2746
        %v2812 = vsub.f32 %v2794, %v2747
        %v2813 = vsub.f32 %v2800, %v2748
        %v2814 = vsub.f32 %v2806, %v2749
        %vm2815 = vcmp.ge.s32.totalorder %v490, 1
        %vm2816 = vmand %vm2815, %vm2380
        %v2817 = vsub.f32 %v1711, %v2742
        %v2818 = vsub.f32 %v1799, %v2743
        %v2819 = vsub.f32 %v1887, %v2744
        %v2820 = vsub.f32 %v1975, %v2745
        %v2821 = vsub.f32 %v2063, %v2746
        %v2822 = vsub.f32 %v2151, %v2747
        %v2823 = vsub.f32 %v2239, %v2748
        %v2824 = vsub.f32 %v2327, %v2749
        %v2825 = vsel %vm2816, %v2817, -1e+30
        %v2826 = vsel %vm2816, %v2818, -1e+30
        %v2827 = vsel %vm2816, %v2819, -1e+30
        %v2828 = vsel %vm2816, %v2820, -1e+30
        %v2829 = vsel %vm2816, %v2821, -1e+30
        %v2830 = vsel %vm2816, %v2822, -1e+30
        %v2831 = vsel %vm2816, %v2823, -1e+30
        %v2832 = vsel %vm2816, %v2824, -1e+30
        %v2833 = vrot.slane %v2825, 4
        %v2834 = vmax.f32 %v2825, %v2833
        %v2835 = vrot.slane %v2834, 2
        %v2836 = vmax.f32 %v2834, %v2835
        %v2837 = vrot.slane %v2836, 1
        %v2838 = vmax.f32 %v2836, %v2837
        %v2839 = vrot.slane %v2826, 4
        %v2840 = vmax.f32 %v2826, %v2839
        %v2841 = vrot.slane %v2840, 2
        %v2842 = vmax.f32 %v2840, %v2841
        %v2843 = vrot.slane %v2842, 1
        %v2844 = vmax.f32 %v2842, %v2843
        %v2845 = vrot.slane %v2827, 4
        %v2846 = vmax.f32 %v2827, %v2845
        %v2847 = vrot.slane %v2846, 2
        %v2848 = vmax.f32 %v2846, %v2847
        %v2849 = vrot.slane %v2848, 1
        %v2850 = vmax.f32 %v2848, %v2849
        %v2851 = vrot.slane %v2828, 4
        %v2852 = vmax.f32 %v2828, %v2851
        %v2853 = vrot.slane %v2852, 2
        %v2854 = vmax.f32 %v2852, %v2853
        %v2855 = vrot.slane %v2854, 1
        %v2856 = vmax.f32 %v2854, %v2855
        %v2857 = vrot.slane %v2829, 4
        %v2858 = vmax.f32 %v2829, %v2857
        %v2859 = vrot.slane %v2858, 2
        %v2860 = vmax.f32 %v2858, %v2859
        %v2861 = vrot.slane %v2860, 1
        %v2862 = vmax.f32 %v2860, %v2861
        %v2863 = vrot.slane %v2830, 4
        %v2864 = vmax.f32 %v2830, %v2863
        %v2865 = vrot.slane %v2864, 2
        %v2866 = vmax.f32 %v2864, %v2865
        %v2867 = vrot.slane %v2866, 1
        %v2868 = vmax.f32 %v2866, %v2867
        %v2869 = vrot.slane %v2831, 4
        %v2870 = vmax.f32 %v2831, %v2869
        %v2871 = vrot.slane %v2870, 2
        %v2872 = vmax.f32 %v2870, %v2871
        %v2873 = vrot.slane %v2872, 1
        %v2874 = vmax.f32 %v2872, %v2873
        %v2875 = vrot.slane %v2832, 4
        %v2876 = vmax.f32 %v2832, %v2875
        %v2877 = vrot.slane %v2876, 2
        %v2878 = vmax.f32 %v2876, %v2877
        %v2879 = vrot.slane %v2878, 1
        %v2880 = vmax.f32 %v2878, %v2879
        %v2881 = vmax.f32 %v2807, %v2838
        %v2882 = vmax.f32 %v2808, %v2844
        %v2883 = vmax.f32 %v2809, %v2850
        %v2884 = vmax.f32 %v2810, %v2856
        %v2885 = vmax.f32 %v2811, %v2862
        %v2886 = vmax.f32 %v2812, %v2868
        %v2887 = vmax.f32 %v2813, %v2874
        %v2888 = vmax.f32 %v2814, %v2880
        %v2889 = vsub.f32 %v2807, %v2881
        %v2890 = vsub.f32 %v2808, %v2882
        %v2891 = vsub.f32 %v2809, %v2883
        %v2892 = vsub.f32 %v2810, %v2884
        %v2893 = vsub.f32 %v2811, %v2885
        %v2894 = vsub.f32 %v2812, %v2886
        %v2895 = vsub.f32 %v2813, %v2887
        %v2896 = vsub.f32 %v2814, %v2888
        %v2897 = vmul.f32 %v2889, 1.442695
        %v2898 = vpow.pop %v2897
        %v2899 = vmul.f32 %v2890, 1.442695
        %v2900 = vpow.pop %v2899
        %v2901 = vmul.f32 %v2891, 1.442695
        %v2902 = vpow.pop %v2901
        %v2903 = vmul.f32 %v2892, 1.442695
        %v2904 = vpow.pop %v2903
        %v2905 = vmul.f32 %v2893, 1.442695
        %v2906 = vpow.pop %v2905
        %v2907 = vmul.f32 %v2894, 1.442695
        %v2908 = vpow.pop %v2907
        %v2909 = vmul.f32 %v2895, 1.442695
        %v2910 = vpow.pop %v2909
        %v2911 = vmul.f32 %v2896, 1.442695
        %v2912 = vpow.pop %v2911
        %v2913 = vsub.f32 %v2838, %v2881
        %v2914 = vsub.f32 %v2844, %v2882
        %v2915 = vsub.f32 %v2850, %v2883
        %v2916 = vsub.f32 %v2856, %v2884
        %v2917 = vsub.f32 %v2862, %v2885
        %v2918 = vsub.f32 %v2868, %v2886
        %v2919 = vsub.f32 %v2874, %v2887
        %v2920 = vsub.f32 %v2880, %v2888
        %v2921 = vmul.f32 %v2913, 1.442695
        %v2922 = vpow.pop %v2921
        %v2923 = vmul.f32 %v2914, 1.442695
        %v2924 = vpow.pop %v2923
        %v2925 = vmul.f32 %v2915, 1.442695
        %v2926 = vpow.pop %v2925
        %v2927 = vmul.f32 %v2916, 1.442695
        %v2928 = vpow.pop %v2927
        %v2929 = vmul.f32 %v2917, 1.442695
        %v2930 = vpow.pop %v2929
        %v2931 = vmul.f32 %v2918, 1.442695
        %v2932 = vpow.pop %v2931
        %v2933 = vmul.f32 %v2919, 1.442695
        %v2934 = vpow.pop %v2933
        %v2935 = vmul.f32 %v2920, 1.442695
        %v2936 = vpow.pop %v2935
        %v2937 = vadd.f32 %v2898, %v2922
        %v2938 = vadd.f32 %v2900, %v2924
        %v2939 = vadd.f32 %v2902, %v2926
        %v2940 = vadd.f32 %v2904, %v2928
        %v2941 = vadd.f32 %v2906, %v2930
        %v2942 = vadd.f32 %v2908, %v2932
        %v2943 = vadd.f32 %v2910, %v2934
        %v2944 = vadd.f32 %v2912, %v2936
        %v2945 = vlog2.pop %v2937
        %v2946 = vmul.f32 %v2945, 0.6931472
        %v2947 = vlog2.pop %v2938
        %v2948 = vmul.f32 %v2947, 0.6931472
        %v2949 = vlog2.pop %v2939
        %v2950 = vmul.f32 %v2949, 0.6931472
        %v2951 = vlog2.pop %v2940
        %v2952 = vmul.f32 %v2951, 0.6931472
        %v2953 = vlog2.pop %v2941
        %v2954 = vmul.f32 %v2953, 0.6931472
        %v2955 = vlog2.pop %v2942
        %v2956 = vmul.f32 %v2955, 0.6931472
        %v2957 = vlog2.pop %v2943
        %v2958 = vmul.f32 %v2957, 0.6931472
        %v2959 = vlog2.pop %v2944
        %v2960 = vmul.f32 %v2959, 0.6931472
        %v2961 = vadd.f32 %v2946, %v2881
        %v2962 = vadd.f32 %v2948, %v2882
        %v2963 = vadd.f32 %v2950, %v2883
        %v2964 = vadd.f32 %v2952, %v2884
        %v2965 = vadd.f32 %v2954, %v2885
        %v2966 = vadd.f32 %v2956, %v2886
        %v2967 = vadd.f32 %v2958, %v2887
        %v2968 = vadd.f32 %v2960, %v2888
        %vm2969 = vcmp.eq.s32.totalorder %v2357, 0
        %vm2970 = vcmp.eq.s32.totalorder %v2359, 0
        %vm2971 = vcmp.eq.s32.totalorder %v2361, 0
        %vm2972 = vcmp.eq.s32.totalorder %v2363, 0
        %vm2973 = vcmp.eq.s32.totalorder %v2365, 0
        %vm2974 = vcmp.eq.s32.totalorder %v2367, 0
        %vm2975 = vcmp.eq.s32.totalorder %v2369, 0
        %vm2976 = vcmp.eq.s32.totalorder %v2371, 0
        %v2977 = vsel %vm2969, %v2838, %v2807
        %v2978 = vsel %vm2970, %v2844, %v2808
        %v2979 = vsel %vm2971, %v2850, %v2809
        %v2980 = vsel %vm2972, %v2856, %v2810
        %v2981 = vsel %vm2973, %v2862, %v2811
        %v2982 = vsel %vm2974, %v2868, %v2812
        %v2983 = vsel %vm2975, %v2874, %v2813
        %v2984 = vsel %vm2976, %v2880, %v2814
        %v2985 = vsub.f32 %v2961, %v2977
        %v2986 = vsub.f32 %v2962, %v2978
        %v2987 = vsub.f32 %v2963, %v2979
        %v2988 = vsub.f32 %v2964, %v2980
        %v2989 = vsub.f32 %v2965, %v2981
        %v2990 = vsub.f32 %v2966, %v2982
        %v2991 = vsub.f32 %v2967, %v2983
        %v2992 = vsub.f32 %v2968, %v2984
        %v2993 = vsel %vm2645, %v2985, 0.0
        %v2994 = vsel %vm2645, %v2986, 0.0
        %v2995 = vadd.f32 %v2993, %v2994
        %v2996 = vsel %vm2645, %v2987, 0.0
        %v2997 = vadd.f32 %v2995, %v2996
        %v2998 = vsel %vm2645, %v2988, 0.0
        %v2999 = vadd.f32 %v2997, %v2998
        %v3000 = vsel %vm2645, %v2989, 0.0
        %v3001 = vadd.f32 %v2999, %v3000
        %v3002 = vsel %vm2645, %v2990, 0.0
        %v3003 = vadd.f32 %v3001, %v3002
        %v3004 = vsel %vm2645, %v2991, 0.0
        %v3005 = vadd.f32 %v3003, %v3004
        %v3006 = vsel %vm2645, %v2992, 0.0
        %v3007 = vadd.f32 %v3005, %v3006
        %3008 = vadd.xlane.f32.xlu0 %v3007
        %v3009 = vpop.xlane.xlu0 %3008
        %v3010 = vrot.slane %v3009, 4
        %v3011 = vadd.f32 %v3009, %v3010
        %v3012 = vrot.slane %v3011, 2
        %v3013 = vadd.f32 %v3011, %v3012
        %v3014 = vrot.slane %v3013, 1
        %v3015 = vadd.f32 %v3013, %v3014
        %s3016 = vtos %v3015
        %v3017 = vlaneseq
        %v3018 = vand.u32 %v3017, 127
        %vm3019 = vcmp.eq.s32.totalorder %v3018, 0
        %v3020 = vstv %s2669
        %v3021 = vsel %vm3019, %v3020, 0.0
        %vm3022 = vcmp.eq.s32.totalorder %v3018, 1
        %v3023 = vstv %s2693
        %v3024 = vsel %vm3022, %v3023, 0.0
        %v3025 = vadd.f32 %v3021, %v3024
        %vm3026 = vcmp.eq.s32.totalorder %v3018, 2
        %v3027 = vstv %s3016
        %v3028 = vsel %vm3026, %v3027, 0.0
        %v3029 = vadd.f32 %v3025, %v3028
        %3030 = vst [vmem:[%s476] sm:$0x1] %v3029
        %s3031 = sand.u32 %s198, 1
        %s3032 = scalar_lea.sflag [#allocation4], %s3031
        %s3033 = sand.u32 %s198, 1
        %s3034 = smul.addr %s3033, 64
        %s3035 = scalar_lea.vmem [#allocation11], %s3034
        %s3036 = sand.u32 %s224, 1
        %s3037 = scalar_lea.sflag [#allocation13], %s3036
        %s3038 = sand.u32 %s224, 1
        %s3039 = scalar_lea.vmem [#allocation12], %s3038
        // Predicated region
        $region65: #{tpu_custom_call.1} parent=43 // pred_check
          %p3040 = pneg %p208
        $region66: #{tpu_custom_call.1} parent=43 // pred_check_branch
          %3042 = sbr.rel (%p3040) target = $region68
        $region67: #{tpu_custom_call.1} parent=43 // pred_region
          %s3043 = smul.u32 8, %s34
          %s3045 = ssub.s32 1024, 1024
          %3046 = vsyncadd %s3032, %s3045
          %s3047 = smul.addr %s3043, 128
          %s3048 = scalar_lea.hbm %s6, %s3047
          %s3049 = sshll.u32 %s3035, 4
          %s3050 = int_to_ptr.vmem [resolvable:$true] %s3049
          %3055 = dma.vmem_to_hbm [thread:$0]  %s3050, 1024, %s3048, %s3032, 128, 128, 8
        $region68: #{tpu_custom_call.1} parent=43 // pred_fallthru
          _
        // Predicated region
        $region69: #{tpu_custom_call.1} parent=43 // pred_check
          %p3056 = pneg %p234
        $region70: #{tpu_custom_call.1} parent=43 // pred_check_branch
          %3058 = sbr.rel (%p3056) target = $region72
        $region71: #{tpu_custom_call.1} parent=43 // pred_region
          %s3060 = ssub.s32 16, 16
          %3061 = vsyncadd %s3037, %s3060
          %s3062 = smul.addr %s34, 16
          %s3063 = scalar_lea.hbm %s7, %s3062
          %s3065 = sshll.u32 %s3039, 4
          %s3066 = int_to_ptr.vmem [resolvable:$true] %s3065
          %3068 = dma.vmem_to_hbm [thread:$0]  %s3066, 16, %s3063, %s3037
        $region72: #{tpu_custom_call.1} parent=43 // pred_fallthru
          _
      $region44: #{tpu_custom_call.1} parent=5 // pred_fallthru
        _
      %p3069 = scmp.le.s32.totalorder 2, %s29
      // Predicated region
      $region73: #{tpu_custom_call.1} parent=5 // pred_check
        %p3070 = pneg %p3069
      $region74: #{tpu_custom_call.1} parent=5 // pred_check_branch
        %3072 = sbr.rel (%p3070) target = $region76
      $region75: #{tpu_custom_call.1} parent=5 // pred_region
        %s3073 = ssub.s32 %s29, 2
        // Predicated region
        $region77: #{tpu_custom_call.1} parent=75 // pred_check
          %p3074 = pneg %p214
        $region78: #{tpu_custom_call.1} parent=75 // pred_check_branch
          %3076 = sbr.rel (%p3074) target = $region80
        $region79: #{tpu_custom_call.1} parent=75 // pred_region
          %s3077 = sand.u32 %s199, 1
          %s3078 = scalar_lea.sflag [#allocation4], %s3077
          %s3079 = sand.u32 %s199, 1
          %s3080 = smul.addr %s3079, 64
          %s3081 = scalar_lea.vmem [#allocation11], %s3080
          %3082 = dma.done %s3078, 1024
        $region80: #{tpu_custom_call.1} parent=75 // pred_fallthru
          _
        // Predicated region
        $region81: #{tpu_custom_call.1} parent=75 // pred_check
          %p3083 = pneg %p240
        $region82: #{tpu_custom_call.1} parent=75 // pred_check_branch
          %3085 = sbr.rel (%p3083) target = $region84
        $region83: #{tpu_custom_call.1} parent=75 // pred_region
          %s3086 = sand.u32 %s225, 1
          %s3087 = scalar_lea.sflag [#allocation13], %s3086
          %s3088 = sand.u32 %s225, 1
          %s3089 = scalar_lea.vmem [#allocation12], %s3088
          %3090 = dma.done %s3087, 16
        $region84: #{tpu_custom_call.1} parent=75 // pred_fallthru
          _
      $region76: #{tpu_custom_call.1} parent=5 // pred_fallthru
        _
    $region6: #{tpu_custom_call.1} parent=1 // loop_footer
      %s33 = sadd.s32 1, %s29
    $region7: #{tpu_custom_call.1} parent=1 // loop_footer_branch
      %28 = sbr.rel target = $region3
    $region8: #{tpu_custom_call.1} parent=1 // loop_exit
      _
    %3091 = vsyncpa [#allocation3], 1
    %s3092 = scalar_lea.sflag [#allocation3], 1
    %3093 = vsyncpa %s3092, 1
    %3094 = vsyncpa [#allocation6], 1
    %s3095 = scalar_lea.sflag [#allocation6], 1
    %3096 = vsyncpa %s3095, 1
    %3097 = vsyncpa [#allocation9], 1
    %s3098 = scalar_lea.sflag [#allocation9], 1
    %3099 = vsyncpa %s3098, 1
    %3100 = vsyncpa [#allocation4], 1
    %s3101 = scalar_lea.sflag [#allocation4], 1
    %3102 = vsyncpa %s3101, 1
    %3103 = vsyncpa [#allocation13], 1
    %s3104 = scalar_lea.sflag [#allocation13], 1
    %3105 = vsyncpa %s3104, 1

</llo_original>
